<compile_context>
chip_gen: v7x
topology: tpu7x:2x2x1
jax: 0.10.0
libtpu: 0.0.40
codegen_flags: <defaults>
</compile_context>

<pallas_src>
import jax
import jax.numpy as jnp
from jax import lax
from jax.experimental import pallas as pl
from jax.experimental.pallas import tpu as pltpu


def _rect_loss_batch_kernel(x_ref, out_ref):
    # x_ref: (C, H, W) one batch in input dtype; out_ref: (1, 1, 1) f32 partial sum.
    C, H, W = x_ref.shape

    # Hoisted constants / index planes (JAX does not CSE broadcasts — keep out of loops).
    row_idx = lax.broadcasted_iota(jnp.int32, (H, 1), 0)      # (H, 1)
    col_idx_r = lax.broadcasted_iota(jnp.int32, (1, W), 1)    # (1, W)
    col_idx_c = lax.broadcasted_iota(jnp.int32, (W, 1), 0)    # (W, 1)
    ones_w = jnp.ones((W, 1), jnp.float32)
    ones_h = jnp.ones((1, H), jnp.float32)

    def softplus_term(x):
        # Stable BCE-with-logits target-independent part: max(x,0) + log1p(exp(-|x|)).
        return jnp.maximum(x, 0.0) + jnp.log1p(jnp.exp(-jnp.abs(x)))

    unroll = C <= 8

    # ---- Pass 1: channel argmax (first-occurrence tie-break == torch.max(1)[1]),
    #      fused with a plane-shaped softplus accumulator (pure VALU/EUP work,
    #      no in-loop cross-lane reductions).
    x0 = x_ref[0].astype(jnp.float32)
    init = (
        x0,                               # running max
        jnp.zeros((H, W), jnp.int32),     # argmax label
        softplus_term(x0),                # (H, W) softplus accumulator
    )

    def argmax_body(c, carry):
        best, label, sp_acc = carry
        xc = x_ref[c].astype(jnp.float32)
        upd = xc > best                   # strict '>' => first-occurrence tie-break
        best = jnp.where(upd, xc, best)
        label = jnp.where(upd, c, label)
        sp_acc = sp_acc + softplus_term(xc)
        return best, label, sp_acc

    _, label, sp_acc = lax.fori_loop(1, C, argmax_body, init, unroll=unroll)
    sp_sum = jnp.sum(sp_acc, axis=(0, 1), keepdims=True)      # single XLU reduce

    # ---- Pass 2: per-class axis-aligned bbox union and sum(x_c * union).
    #      Presence counts and the masked sum are MXU matvecs; only an (H,1)
    #      accumulator is carried, reduced once after the loop.
    def class_body(c, acc_h):
        xc = x_ref[c].astype(jnp.float32)
        mask_f = (label == c).astype(jnp.float32)              # (H, W): 1 cmp + 1 sel/elt
        # Row / column presence via the idle MXU (instead of XLU any-reductions).
        row_cnt = jnp.dot(mask_f, ones_w, preferred_element_type=jnp.float32)  # (H, 1)
        col_cnt = jnp.dot(ones_h, mask_f, preferred_element_type=jnp.float32)  # (1, W)
        row_any = row_cnt > 0.0
        col_any = col_cnt > 0.0
        # Bbox extents; absent class => rmin > rmax (and cmin > cmax) => empty union.
        rmin = jnp.min(jnp.where(row_any, row_idx, H), axis=(0, 1), keepdims=True)
        rmax = jnp.max(jnp.where(row_any, row_idx, -1), axis=(0, 1), keepdims=True)
        cmin = jnp.min(jnp.where(col_any, col_idx_r, W), axis=(0, 1), keepdims=True)
        cmax = jnp.max(jnp.where(col_any, col_idx_r, -1), axis=(0, 1), keepdims=True)
        row_in = ((row_idx >= rmin) & (row_idx <= rmax)).astype(jnp.float32)      # (H, 1)
        col_in = ((col_idx_c >= cmin) & (col_idx_c <= cmax)).astype(jnp.float32)  # (W, 1)
        # sum(x_c * union) = row_inᵀ · (X_c @ col_in): MXU matvec + (H,1) FMA.
        colsum = jnp.dot(xc, col_in, preferred_element_type=jnp.float32)          # (H, 1)
        return acc_h + row_in * colsum

    acc_h = lax.fori_loop(
        0, C, class_body, jnp.zeros((H, 1), jnp.float32), unroll=unroll
    )
    xz_sum = jnp.sum(acc_h, axis=(0, 1), keepdims=True)        # single XLU reduce

    # BCEWithLogits(x, union) summed over (C, H, W) = sum softplus(x) - sum x*union.
    out_ref[0] = sp_sum - xz_sum


def _vmem_capacity_bytes():
    """Best-effort device VMEM capacity; conservative fallback (v7x per-TC 64 MiB)."""
    try:
        info = pltpu.get_tpu_info()
        cap = getattr(info, "vmem_capacity_bytes", None)
        if cap:
            return int(cap)
    except Exception:
        pass
    return 64 * 2**20


def rect_loss(y_pred, weight=1.0, reduction="mean"):
    """Pallas TPU implementation of RectLoss.forward (scalar result)."""
    B, C, H, W = y_pred.shape

    # VMEM budget: one (C, H, W) block (double-buffered if it fits) + small scratch,
    # clamped to the actual device VMEM (100 MiB-style caps are invalid on v7x).
    block_bytes = C * H * W * y_pred.dtype.itemsize
    vmem_budget = int(0.75 * _vmem_capacity_bytes())
    vmem_limit = int(min(vmem_budget, max(32 * 2**20, 4 * block_bytes)))

    index_map = lambda b: (b, 0, 0, 0)
    in_spec = pl.BlockSpec((None, C, H, W), index_map)
    if 2 * block_bytes > vmem_budget:
        # Compute per block is ~2 full passes over C channels, so DMA is a small
        # fraction of step time: drop to single buffering rather than re-tiling.
        # TODO(synk): no multi-pass tiling fallback if even ONE block exceeds VMEM.
        try:
            in_spec = pl.BlockSpec(
                (None, C, H, W), index_map, pipeline_mode=pl.Buffered(1)
            )
        except TypeError:
            pass  # older BlockSpec API: keep default double-buffering

    partials = pl.pallas_call(
        _rect_loss_batch_kernel,
        out_shape=jax.ShapeDtypeStruct((B, 1, 1), jnp.float32),
        grid=(B,),
        in_specs=[in_spec],
        out_specs=pl.BlockSpec((1, 1, 1), lambda b: (b, 0, 0)),
        compiler_params=pltpu.CompilerParams(
            dimension_semantics=("parallel",),  # megacore-shardable over batch
            vmem_limit_bytes=vmem_limit,
        ),
    )(y_pred)

    total = jnp.sum(partials)  # per-batch partials combined in f32 here
    if reduction == "mean":
        return (weight * total) / float(B * C * H * W)
    elif reduction == "sum":
        return weight * total
    else:
        # TODO(synk): reduction='none' (full per-element loss tensor) not implemented.
        raise NotImplementedError("only 'mean' and 'sum' reductions are supported")


if __name__ == "__main__":
    key = jax.random.PRNGKey(0)
    B, C, H, W = 2, 4, 16, 16
    y_pred = jax.random.normal(key, (B, C, H, W), dtype=jnp.float32)

    loss = rect_loss(y_pred, weight=1.0, reduction="mean")
    jax.block_until_ready(loss)
    assert loss.shape == () and bool(jnp.isfinite(loss))
    print("KERNEL_OK")
</pallas_src>

<mosaic_0001>
module attributes {stable_mosaic.version = 11 : i64} {
  func.func @_rect_loss_batch_kernel(%arg0: i32, %arg1: memref<1x4x16x16xf32, #tpu.memory_space<vmem>>, %arg2: memref<1x1x1xf32, #tpu.memory_space<vmem>>) attributes {dimension_semantics = [#tpu.dimension_semantics<parallel>], iteration_bounds = array<i64: 2>, scalar_prefetch = 0 : i64, scratch_operands = 0 : i64, tpu.core_type = #tpu.core_type<tc>, window_params = [{transform_indices = @transform_0, window_bounds = array<i64: 1, 4, 16, 16>}, {transform_indices = @transform_1, window_bounds = array<i64: 1, 1, 1>}]} {
    %0 = tpu.iota {dimensions = array<i32: 0>} : vector<16x1xi32>
    %1 = tpu.iota {dimensions = array<i32: 1>} : vector<1x16xi32>
    %2 = tpu.iota {dimensions = array<i32: 0>} : vector<16x1xi32>
    %cst = arith.constant 1.000000e+00 : f32
    %3 = vector.broadcast %cst : f32 to vector<16x1xf32>
    %cst_0 = arith.constant 1.000000e+00 : f32
    %4 = vector.broadcast %cst_0 : f32 to vector<1x16xf32>
    %c0 = arith.constant 0 : index
    %c0_1 = arith.constant 0 : index
    %c0_2 = arith.constant 0 : index
    %c0_3 = arith.constant 0 : index
    %5 = vector.load %arg1[%c0, %c0_1, %c0_2, %c0_3] : memref<1x4x16x16xf32, #tpu.memory_space<vmem>>, vector<1x1x16x16xf32>
    %6 = vector.shape_cast %5 : vector<1x1x16x16xf32> to vector<16x16xf32>
    %c0_i32 = arith.constant 0 : i32
    %7 = vector.broadcast %c0_i32 : i32 to vector<16x16xi32>
    %cst_4 = arith.constant 0.000000e+00 : f32
    %8 = vector.broadcast %cst_4 : f32 to vector<16x16xf32>
    %9 = arith.maximumf %6, %8 : vector<16x16xf32>
    %10 = math.absf %6 : vector<16x16xf32>
    %cst_5 = arith.constant 0.000000e+00 : f32
    %11 = vector.broadcast %cst_5 : f32 to vector<16x16xf32>
    %12 = arith.subf %11, %10 : vector<16x16xf32>
    %13 = math.exp %12 : vector<16x16xf32>
    %14 = math.log1p %13 : vector<16x16xf32>
    %15 = arith.addf %9, %14 : vector<16x16xf32>
    %c1_i32 = arith.constant 1 : i32
    %c0_6 = arith.constant 0 : index
    %16 = arith.index_cast %c1_i32 : i32 to index
    %c0_7 = arith.constant 0 : index
    %c0_8 = arith.constant 0 : index
    %17 = vector.load %arg1[%c0_6, %16, %c0_7, %c0_8] : memref<1x4x16x16xf32, #tpu.memory_space<vmem>>, vector<1x1x16x16xf32>
    %18 = vector.shape_cast %17 : vector<1x1x16x16xf32> to vector<16x16xf32>
    %19 = arith.cmpf ogt, %18, %6 : vector<16x16xf32>
    %20 = arith.select %19, %18, %6 : vector<16x16xi1>, vector<16x16xf32>
    %21 = vector.broadcast %c1_i32 : i32 to vector<16x16xi32>
    %22 = arith.select %19, %21, %7 : vector<16x16xi1>, vector<16x16xi32>
    %cst_9 = arith.constant 0.000000e+00 : f32
    %23 = vector.broadcast %cst_9 : f32 to vector<16x16xf32>
    %24 = arith.maximumf %18, %23 : vector<16x16xf32>
    %25 = math.absf %18 : vector<16x16xf32>
    %cst_10 = arith.constant 0.000000e+00 : f32
    %26 = vector.broadcast %cst_10 : f32 to vector<16x16xf32>
    %27 = arith.subf %26, %25 : vector<16x16xf32>
    %28 = math.exp %27 : vector<16x16xf32>
    %29 = math.log1p %28 : vector<16x16xf32>
    %30 = arith.addf %24, %29 : vector<16x16xf32>
    %31 = arith.addf %15, %30 : vector<16x16xf32>
    %c2_i32 = arith.constant 2 : i32
    %c0_11 = arith.constant 0 : index
    %32 = arith.index_cast %c2_i32 : i32 to index
    %c0_12 = arith.constant 0 : index
    %c0_13 = arith.constant 0 : index
    %33 = vector.load %arg1[%c0_11, %32, %c0_12, %c0_13] : memref<1x4x16x16xf32, #tpu.memory_space<vmem>>, vector<1x1x16x16xf32>
    %34 = vector.shape_cast %33 : vector<1x1x16x16xf32> to vector<16x16xf32>
    %35 = arith.cmpf ogt, %34, %20 : vector<16x16xf32>
    %36 = arith.select %35, %34, %20 : vector<16x16xi1>, vector<16x16xf32>
    %37 = vector.broadcast %c2_i32 : i32 to vector<16x16xi32>
    %38 = arith.select %35, %37, %22 : vector<16x16xi1>, vector<16x16xi32>
    %cst_14 = arith.constant 0.000000e+00 : f32
    %39 = vector.broadcast %cst_14 : f32 to vector<16x16xf32>
    %40 = arith.maximumf %34, %39 : vector<16x16xf32>
    %41 = math.absf %34 : vector<16x16xf32>
    %cst_15 = arith.constant 0.000000e+00 : f32
    %42 = vector.broadcast %cst_15 : f32 to vector<16x16xf32>
    %43 = arith.subf %42, %41 : vector<16x16xf32>
    %44 = math.exp %43 : vector<16x16xf32>
    %45 = math.log1p %44 : vector<16x16xf32>
    %46 = arith.addf %40, %45 : vector<16x16xf32>
    %47 = arith.addf %31, %46 : vector<16x16xf32>
    %c3_i32 = arith.constant 3 : i32
    %c0_16 = arith.constant 0 : index
    %48 = arith.index_cast %c3_i32 : i32 to index
    %c0_17 = arith.constant 0 : index
    %c0_18 = arith.constant 0 : index
    %49 = vector.load %arg1[%c0_16, %48, %c0_17, %c0_18] : memref<1x4x16x16xf32, #tpu.memory_space<vmem>>, vector<1x1x16x16xf32>
    %50 = vector.shape_cast %49 : vector<1x1x16x16xf32> to vector<16x16xf32>
    %51 = arith.cmpf ogt, %50, %36 : vector<16x16xf32>
    %52 = arith.select %51, %50, %36 : vector<16x16xi1>, vector<16x16xf32>
    %53 = vector.broadcast %c3_i32 : i32 to vector<16x16xi32>
    %54 = arith.select %51, %53, %38 : vector<16x16xi1>, vector<16x16xi32>
    %cst_19 = arith.constant 0.000000e+00 : f32
    %55 = vector.broadcast %cst_19 : f32 to vector<16x16xf32>
    %56 = arith.maximumf %50, %55 : vector<16x16xf32>
    %57 = math.absf %50 : vector<16x16xf32>
    %cst_20 = arith.constant 0.000000e+00 : f32
    %58 = vector.broadcast %cst_20 : f32 to vector<16x16xf32>
    %59 = arith.subf %58, %57 : vector<16x16xf32>
    %60 = math.exp %59 : vector<16x16xf32>
    %61 = math.log1p %60 : vector<16x16xf32>
    %62 = arith.addf %56, %61 : vector<16x16xf32>
    %63 = arith.addf %47, %62 : vector<16x16xf32>
    %c3_i32_21 = arith.constant 3 : i32
    %64 = vector.shape_cast %63 : vector<16x16xf32> to vector<1x16x16xf32>
    %cst_22 = arith.constant dense<0.000000e+00> : vector<1xf32>
    %65 = vector.multi_reduction <add>, %64, %cst_22 [1, 2] : vector<1x16x16xf32> to vector<1xf32>
    %66 = vector.shape_cast %65 : vector<1xf32> to vector<1x1x1xf32>
    %67 = vector.extract %66[0, 0, 0] : f32 from vector<1x1x1xf32>
    %68 = vector.broadcast %67 : f32 to vector<1x1xf32>
    %cst_23 = arith.constant 0.000000e+00 : f32
    %69 = vector.broadcast %cst_23 : f32 to vector<16x1xf32>
    %c0_i32_24 = arith.constant 0 : i32
    %c0_25 = arith.constant 0 : index
    %70 = arith.index_cast %c0_i32_24 : i32 to index
    %c0_26 = arith.constant 0 : index
    %c0_27 = arith.constant 0 : index
    %71 = vector.load %arg1[%c0_25, %70, %c0_26, %c0_27] : memref<1x4x16x16xf32, #tpu.memory_space<vmem>>, vector<1x1x16x16xf32>
    %72 = vector.shape_cast %71 : vector<1x1x16x16xf32> to vector<16x16xf32>
    %73 = vector.broadcast %c0_i32_24 : i32 to vector<16x16xi32>
    %74 = arith.cmpi eq, %54, %73 : vector<16x16xi32>
    %75 = arith.extui %74 : vector<16x16xi1> to vector<16x16xi32>
    %76 = arith.sitofp %75 : vector<16x16xi32> to vector<16x16xf32>
    %cst_28 = arith.constant dense<0.000000e+00> : vector<16x1xf32>
    %77 = tpu.matmul %76, %3, %cst_28 {dimension_numbers = #tpu.dot_dimension_numbers<[1], [0], [0], [1], [0, 0, 1, 1], [], []>} : vector<16x16xf32>, vector<16x1xf32>, vector<16x1xf32> -> vector<16x1xf32>
    %cst_29 = arith.constant dense<0.000000e+00> : vector<1x16xf32>
    %78 = tpu.matmul %4, %76, %cst_29 {dimension_numbers = #tpu.dot_dimension_numbers<[1], [0], [0], [1], [0, 0, 1, 1], [], []>} : vector<1x16xf32>, vector<16x16xf32>, vector<1x16xf32> -> vector<1x16xf32>
    %cst_30 = arith.constant 0.000000e+00 : f32
    %79 = vector.broadcast %cst_30 : f32 to vector<16x1xf32>
    %80 = arith.cmpf ogt, %77, %79 : vector<16x1xf32>
    %cst_31 = arith.constant 0.000000e+00 : f32
    %81 = vector.broadcast %cst_31 : f32 to vector<1x16xf32>
    %82 = arith.cmpf ogt, %78, %81 : vector<1x16xf32>
    %c16_i32 = arith.constant 16 : i32
    %83 = vector.broadcast %c16_i32 : i32 to vector<16x1xi32>
    %84 = arith.select %80, %0, %83 : vector<16x1xi1>, vector<16x1xi32>
    %85 = vector.shape_cast %84 : vector<16x1xi32> to vector<1x16x1xi32>
    %cst_32 = arith.constant dense<2147483647> : vector<1xi32>
    %86 = vector.multi_reduction <minsi>, %85, %cst_32 [1, 2] : vector<1x16x1xi32> to vector<1xi32>
    %87 = vector.shape_cast %86 : vector<1xi32> to vector<1x1x1xi32>
    %88 = vector.extract %87[0, 0, 0] : i32 from vector<1x1x1xi32>
    %89 = vector.broadcast %88 : i32 to vector<1x1xi32>
    %c-1_i32 = arith.constant -1 : i32
    %90 = vector.broadcast %c-1_i32 : i32 to vector<16x1xi32>
    %91 = arith.select %80, %0, %90 : vector<16x1xi1>, vector<16x1xi32>
    %92 = vector.shape_cast %91 : vector<16x1xi32> to vector<1x16x1xi32>
    %cst_33 = arith.constant dense<-2147483648> : vector<1xi32>
    %93 = vector.multi_reduction <maxsi>, %92, %cst_33 [1, 2] : vector<1x16x1xi32> to vector<1xi32>
    %94 = vector.shape_cast %93 : vector<1xi32> to vector<1x1x1xi32>
    %95 = vector.extract %94[0, 0, 0] : i32 from vector<1x1x1xi32>
    %96 = vector.broadcast %95 : i32 to vector<1x1xi32>
    %c16_i32_34 = arith.constant 16 : i32
    %97 = vector.broadcast %c16_i32_34 : i32 to vector<1x16xi32>
    %98 = arith.select %82, %1, %97 : vector<1x16xi1>, vector<1x16xi32>
    %99 = vector.shape_cast %98 : vector<1x16xi32> to vector<1x1x16xi32>
    %cst_35 = arith.constant dense<2147483647> : vector<1xi32>
    %100 = vector.multi_reduction <minsi>, %99, %cst_35 [1, 2] : vector<1x1x16xi32> to vector<1xi32>
    %101 = vector.shape_cast %100 : vector<1xi32> to vector<1x1x1xi32>
    %102 = vector.extract %101[0, 0, 0] : i32 from vector<1x1x1xi32>
    %103 = vector.broadcast %102 : i32 to vector<1x1xi32>
    %c-1_i32_36 = arith.constant -1 : i32
    %104 = vector.broadcast %c-1_i32_36 : i32 to vector<1x16xi32>
    %105 = arith.select %82, %1, %104 : vector<1x16xi1>, vector<1x16xi32>
    %106 = vector.shape_cast %105 : vector<1x16xi32> to vector<1x1x16xi32>
    %cst_37 = arith.constant dense<-2147483648> : vector<1xi32>
    %107 = vector.multi_reduction <maxsi>, %106, %cst_37 [1, 2] : vector<1x1x16xi32> to vector<1xi32>
    %108 = vector.shape_cast %107 : vector<1xi32> to vector<1x1x1xi32>
    %109 = vector.extract %108[0, 0, 0] : i32 from vector<1x1x1xi32>
    %110 = vector.broadcast %109 : i32 to vector<1x1xi32>
    %111 = vector.broadcast %89 : vector<1x1xi32> to vector<16x1xi32>
    %112 = arith.cmpi sge, %0, %111 : vector<16x1xi32>
    %113 = vector.broadcast %96 : vector<1x1xi32> to vector<16x1xi32>
    %114 = arith.cmpi sle, %0, %113 : vector<16x1xi32>
    %115 = arith.andi %112, %114 : vector<16x1xi1>
    %116 = arith.extui %115 : vector<16x1xi1> to vector<16x1xi32>
    %117 = arith.sitofp %116 : vector<16x1xi32> to vector<16x1xf32>
    %118 = vector.broadcast %103 : vector<1x1xi32> to vector<16x1xi32>
    %119 = arith.cmpi sge, %2, %118 : vector<16x1xi32>
    %120 = vector.broadcast %110 : vector<1x1xi32> to vector<16x1xi32>
    %121 = arith.cmpi sle, %2, %120 : vector<16x1xi32>
    %122 = arith.andi %119, %121 : vector<16x1xi1>
    %123 = arith.extui %122 : vector<16x1xi1> to vector<16x1xi32>
    %124 = arith.sitofp %123 : vector<16x1xi32> to vector<16x1xf32>
    %cst_38 = arith.constant dense<0.000000e+00> : vector<16x1xf32>
    %125 = tpu.matmul %72, %124, %cst_38 {dimension_numbers = #tpu.dot_dimension_numbers<[1], [0], [0], [1], [0, 0, 1, 1], [], []>} : vector<16x16xf32>, vector<16x1xf32>, vector<16x1xf32> -> vector<16x1xf32>
    %126 = arith.mulf %117, %125 : vector<16x1xf32>
    %127 = arith.addf %69, %126 : vector<16x1xf32>
    %c1_i32_39 = arith.constant 1 : i32
    %c0_40 = arith.constant 0 : index
    %128 = arith.index_cast %c1_i32_39 : i32 to index
    %c0_41 = arith.constant 0 : index
    %c0_42 = arith.constant 0 : index
    %129 = vector.load %arg1[%c0_40, %128, %c0_41, %c0_42] : memref<1x4x16x16xf32, #tpu.memory_space<vmem>>, vector<1x1x16x16xf32>
    %130 = vector.shape_cast %129 : vector<1x1x16x16xf32> to vector<16x16xf32>
    %131 = vector.broadcast %c1_i32_39 : i32 to vector<16x16xi32>
    %132 = arith.cmpi eq, %54, %131 : vector<16x16xi32>
    %133 = arith.extui %132 : vector<16x16xi1> to vector<16x16xi32>
    %134 = arith.sitofp %133 : vector<16x16xi32> to vector<16x16xf32>
    %cst_43 = arith.constant dense<0.000000e+00> : vector<16x1xf32>
    %135 = tpu.matmul %134, %3, %cst_43 {dimension_numbers = #tpu.dot_dimension_numbers<[1], [0], [0], [1], [0, 0, 1, 1], [], []>} : vector<16x16xf32>, vector<16x1xf32>, vector<16x1xf32> -> vector<16x1xf32>
    %cst_44 = arith.constant dense<0.000000e+00> : vector<1x16xf32>
    %136 = tpu.matmul %4, %134, %cst_44 {dimension_numbers = #tpu.dot_dimension_numbers<[1], [0], [0], [1], [0, 0, 1, 1], [], []>} : vector<1x16xf32>, vector<16x16xf32>, vector<1x16xf32> -> vector<1x16xf32>
    %cst_45 = arith.constant 0.000000e+00 : f32
    %137 = vector.broadcast %cst_45 : f32 to vector<16x1xf32>
    %138 = arith.cmpf ogt, %135, %137 : vector<16x1xf32>
    %cst_46 = arith.constant 0.000000e+00 : f32
    %139 = vector.broadcast %cst_46 : f32 to vector<1x16xf32>
    %140 = arith.cmpf ogt, %136, %139 : vector<1x16xf32>
    %c16_i32_47 = arith.constant 16 : i32
    %141 = vector.broadcast %c16_i32_47 : i32 to vector<16x1xi32>
    %142 = arith.select %138, %0, %141 : vector<16x1xi1>, vector<16x1xi32>
    %143 = vector.shape_cast %142 : vector<16x1xi32> to vector<1x16x1xi32>
    %cst_48 = arith.constant dense<2147483647> : vector<1xi32>
    %144 = vector.multi_reduction <minsi>, %143, %cst_48 [1, 2] : vector<1x16x1xi32> to vector<1xi32>
    %145 = vector.shape_cast %144 : vector<1xi32> to vector<1x1x1xi32>
    %146 = vector.extract %145[0, 0, 0] : i32 from vector<1x1x1xi32>
    %147 = vector.broadcast %146 : i32 to vector<1x1xi32>
    %c-1_i32_49 = arith.constant -1 : i32
    %148 = vector.broadcast %c-1_i32_49 : i32 to vector<16x1xi32>
    %149 = arith.select %138, %0, %148 : vector<16x1xi1>, vector<16x1xi32>
    %150 = vector.shape_cast %149 : vector<16x1xi32> to vector<1x16x1xi32>
    %cst_50 = arith.constant dense<-2147483648> : vector<1xi32>
    %151 = vector.multi_reduction <maxsi>, %150, %cst_50 [1, 2] : vector<1x16x1xi32> to vector<1xi32>
    %152 = vector.shape_cast %151 : vector<1xi32> to vector<1x1x1xi32>
    %153 = vector.extract %152[0, 0, 0] : i32 from vector<1x1x1xi32>
    %154 = vector.broadcast %153 : i32 to vector<1x1xi32>
    %c16_i32_51 = arith.constant 16 : i32
    %155 = vector.broadcast %c16_i32_51 : i32 to vector<1x16xi32>
    %156 = arith.select %140, %1, %155 : vector<1x16xi1>, vector<1x16xi32>
    %157 = vector.shape_cast %156 : vector<1x16xi32> to vector<1x1x16xi32>
    %cst_52 = arith.constant dense<2147483647> : vector<1xi32>
    %158 = vector.multi_reduction <minsi>, %157, %cst_52 [1, 2] : vector<1x1x16xi32> to vector<1xi32>
    %159 = vector.shape_cast %158 : vector<1xi32> to vector<1x1x1xi32>
    %160 = vector.extract %159[0, 0, 0] : i32 from vector<1x1x1xi32>
    %161 = vector.broadcast %160 : i32 to vector<1x1xi32>
    %c-1_i32_53 = arith.constant -1 : i32
    %162 = vector.broadcast %c-1_i32_53 : i32 to vector<1x16xi32>
    %163 = arith.select %140, %1, %162 : vector<1x16xi1>, vector<1x16xi32>
    %164 = vector.shape_cast %163 : vector<1x16xi32> to vector<1x1x16xi32>
    %cst_54 = arith.constant dense<-2147483648> : vector<1xi32>
    %165 = vector.multi_reduction <maxsi>, %164, %cst_54 [1, 2] : vector<1x1x16xi32> to vector<1xi32>
    %166 = vector.shape_cast %165 : vector<1xi32> to vector<1x1x1xi32>
    %167 = vector.extract %166[0, 0, 0] : i32 from vector<1x1x1xi32>
    %168 = vector.broadcast %167 : i32 to vector<1x1xi32>
    %169 = vector.broadcast %147 : vector<1x1xi32> to vector<16x1xi32>
    %170 = arith.cmpi sge, %0, %169 : vector<16x1xi32>
    %171 = vector.broadcast %154 : vector<1x1xi32> to vector<16x1xi32>
    %172 = arith.cmpi sle, %0, %171 : vector<16x1xi32>
    %173 = arith.andi %170, %172 : vector<16x1xi1>
    %174 = arith.extui %173 : vector<16x1xi1> to vector<16x1xi32>
    %175 = arith.sitofp %174 : vector<16x1xi32> to vector<16x1xf32>
    %176 = vector.broadcast %161 : vector<1x1xi32> to vector<16x1xi32>
    %177 = arith.cmpi sge, %2, %176 : vector<16x1xi32>
    %178 = vector.broadcast %168 : vector<1x1xi32> to vector<16x1xi32>
    %179 = arith.cmpi sle, %2, %178 : vector<16x1xi32>
    %180 = arith.andi %177, %179 : vector<16x1xi1>
    %181 = arith.extui %180 : vector<16x1xi1> to vector<16x1xi32>
    %182 = arith.sitofp %181 : vector<16x1xi32> to vector<16x1xf32>
    %cst_55 = arith.constant dense<0.000000e+00> : vector<16x1xf32>
    %183 = tpu.matmul %130, %182, %cst_55 {dimension_numbers = #tpu.dot_dimension_numbers<[1], [0], [0], [1], [0, 0, 1, 1], [], []>} : vector<16x16xf32>, vector<16x1xf32>, vector<16x1xf32> -> vector<16x1xf32>
    %184 = arith.mulf %175, %183 : vector<16x1xf32>
    %185 = arith.addf %127, %184 : vector<16x1xf32>
    %c2_i32_56 = arith.constant 2 : i32
    %c0_57 = arith.constant 0 : index
    %186 = arith.index_cast %c2_i32_56 : i32 to index
    %c0_58 = arith.constant 0 : index
    %c0_59 = arith.constant 0 : index
    %187 = vector.load %arg1[%c0_57, %186, %c0_58, %c0_59] : memref<1x4x16x16xf32, #tpu.memory_space<vmem>>, vector<1x1x16x16xf32>
    %188 = vector.shape_cast %187 : vector<1x1x16x16xf32> to vector<16x16xf32>
    %189 = vector.broadcast %c2_i32_56 : i32 to vector<16x16xi32>
    %190 = arith.cmpi eq, %54, %189 : vector<16x16xi32>
    %191 = arith.extui %190 : vector<16x16xi1> to vector<16x16xi32>
    %192 = arith.sitofp %191 : vector<16x16xi32> to vector<16x16xf32>
    %cst_60 = arith.constant dense<0.000000e+00> : vector<16x1xf32>
    %193 = tpu.matmul %192, %3, %cst_60 {dimension_numbers = #tpu.dot_dimension_numbers<[1], [0], [0], [1], [0, 0, 1, 1], [], []>} : vector<16x16xf32>, vector<16x1xf32>, vector<16x1xf32> -> vector<16x1xf32>
    %cst_61 = arith.constant dense<0.000000e+00> : vector<1x16xf32>
    %194 = tpu.matmul %4, %192, %cst_61 {dimension_numbers = #tpu.dot_dimension_numbers<[1], [0], [0], [1], [0, 0, 1, 1], [], []>} : vector<1x16xf32>, vector<16x16xf32>, vector<1x16xf32> -> vector<1x16xf32>
    %cst_62 = arith.constant 0.000000e+00 : f32
    %195 = vector.broadcast %cst_62 : f32 to vector<16x1xf32>
    %196 = arith.cmpf ogt, %193, %195 : vector<16x1xf32>
    %cst_63 = arith.constant 0.000000e+00 : f32
    %197 = vector.broadcast %cst_63 : f32 to vector<1x16xf32>
    %198 = arith.cmpf ogt, %194, %197 : vector<1x16xf32>
    %c16_i32_64 = arith.constant 16 : i32
    %199 = vector.broadcast %c16_i32_64 : i32 to vector<16x1xi32>
    %200 = arith.select %196, %0, %199 : vector<16x1xi1>, vector<16x1xi32>
    %201 = vector.shape_cast %200 : vector<16x1xi32> to vector<1x16x1xi32>
    %cst_65 = arith.constant dense<2147483647> : vector<1xi32>
    %202 = vector.multi_reduction <minsi>, %201, %cst_65 [1, 2] : vector<1x16x1xi32> to vector<1xi32>
    %203 = vector.shape_cast %202 : vector<1xi32> to vector<1x1x1xi32>
    %204 = vector.extract %203[0, 0, 0] : i32 from vector<1x1x1xi32>
    %205 = vector.broadcast %204 : i32 to vector<1x1xi32>
    %c-1_i32_66 = arith.constant -1 : i32
    %206 = vector.broadcast %c-1_i32_66 : i32 to vector<16x1xi32>
    %207 = arith.select %196, %0, %206 : vector<16x1xi1>, vector<16x1xi32>
    %208 = vector.shape_cast %207 : vector<16x1xi32> to vector<1x16x1xi32>
    %cst_67 = arith.constant dense<-2147483648> : vector<1xi32>
    %209 = vector.multi_reduction <maxsi>, %208, %cst_67 [1, 2] : vector<1x16x1xi32> to vector<1xi32>
    %210 = vector.shape_cast %209 : vector<1xi32> to vector<1x1x1xi32>
    %211 = vector.extract %210[0, 0, 0] : i32 from vector<1x1x1xi32>
    %212 = vector.broadcast %211 : i32 to vector<1x1xi32>
    %c16_i32_68 = arith.constant 16 : i32
    %213 = vector.broadcast %c16_i32_68 : i32 to vector<1x16xi32>
    %214 = arith.select %198, %1, %213 : vector<1x16xi1>, vector<1x16xi32>
    %215 = vector.shape_cast %214 : vector<1x16xi32> to vector<1x1x16xi32>
    %cst_69 = arith.constant dense<2147483647> : vector<1xi32>
    %216 = vector.multi_reduction <minsi>, %215, %cst_69 [1, 2] : vector<1x1x16xi32> to vector<1xi32>
    %217 = vector.shape_cast %216 : vector<1xi32> to vector<1x1x1xi32>
    %218 = vector.extract %217[0, 0, 0] : i32 from vector<1x1x1xi32>
    %219 = vector.broadcast %218 : i32 to vector<1x1xi32>
    %c-1_i32_70 = arith.constant -1 : i32
    %220 = vector.broadcast %c-1_i32_70 : i32 to vector<1x16xi32>
    %221 = arith.select %198, %1, %220 : vector<1x16xi1>, vector<1x16xi32>
    %222 = vector.shape_cast %221 : vector<1x16xi32> to vector<1x1x16xi32>
    %cst_71 = arith.constant dense<-2147483648> : vector<1xi32>
    %223 = vector.multi_reduction <maxsi>, %222, %cst_71 [1, 2] : vector<1x1x16xi32> to vector<1xi32>
    %224 = vector.shape_cast %223 : vector<1xi32> to vector<1x1x1xi32>
    %225 = vector.extract %224[0, 0, 0] : i32 from vector<1x1x1xi32>
    %226 = vector.broadcast %225 : i32 to vector<1x1xi32>
    %227 = vector.broadcast %205 : vector<1x1xi32> to vector<16x1xi32>
    %228 = arith.cmpi sge, %0, %227 : vector<16x1xi32>
    %229 = vector.broadcast %212 : vector<1x1xi32> to vector<16x1xi32>
    %230 = arith.cmpi sle, %0, %229 : vector<16x1xi32>
    %231 = arith.andi %228, %230 : vector<16x1xi1>
    %232 = arith.extui %231 : vector<16x1xi1> to vector<16x1xi32>
    %233 = arith.sitofp %232 : vector<16x1xi32> to vector<16x1xf32>
    %234 = vector.broadcast %219 : vector<1x1xi32> to vector<16x1xi32>
    %235 = arith.cmpi sge, %2, %234 : vector<16x1xi32>
    %236 = vector.broadcast %226 : vector<1x1xi32> to vector<16x1xi32>
    %237 = arith.cmpi sle, %2, %236 : vector<16x1xi32>
    %238 = arith.andi %235, %237 : vector<16x1xi1>
    %239 = arith.extui %238 : vector<16x1xi1> to vector<16x1xi32>
    %240 = arith.sitofp %239 : vector<16x1xi32> to vector<16x1xf32>
    %cst_72 = arith.constant dense<0.000000e+00> : vector<16x1xf32>
    %241 = tpu.matmul %188, %240, %cst_72 {dimension_numbers = #tpu.dot_dimension_numbers<[1], [0], [0], [1], [0, 0, 1, 1], [], []>} : vector<16x16xf32>, vector<16x1xf32>, vector<16x1xf32> -> vector<16x1xf32>
    %242 = arith.mulf %233, %241 : vector<16x1xf32>
    %243 = arith.addf %185, %242 : vector<16x1xf32>
    %c3_i32_73 = arith.constant 3 : i32
    %c0_74 = arith.constant 0 : index
    %244 = arith.index_cast %c3_i32_73 : i32 to index
    %c0_75 = arith.constant 0 : index
    %c0_76 = arith.constant 0 : index
    %245 = vector.load %arg1[%c0_74, %244, %c0_75, %c0_76] : memref<1x4x16x16xf32, #tpu.memory_space<vmem>>, vector<1x1x16x16xf32>
    %246 = vector.shape_cast %245 : vector<1x1x16x16xf32> to vector<16x16xf32>
    %247 = vector.broadcast %c3_i32_73 : i32 to vector<16x16xi32>
    %248 = arith.cmpi eq, %54, %247 : vector<16x16xi32>
    %249 = arith.extui %248 : vector<16x16xi1> to vector<16x16xi32>
    %250 = arith.sitofp %249 : vector<16x16xi32> to vector<16x16xf32>
    %cst_77 = arith.constant dense<0.000000e+00> : vector<16x1xf32>
    %251 = tpu.matmul %250, %3, %cst_77 {dimension_numbers = #tpu.dot_dimension_numbers<[1], [0], [0], [1], [0, 0, 1, 1], [], []>} : vector<16x16xf32>, vector<16x1xf32>, vector<16x1xf32> -> vector<16x1xf32>
    %cst_78 = arith.constant dense<0.000000e+00> : vector<1x16xf32>
    %252 = tpu.matmul %4, %250, %cst_78 {dimension_numbers = #tpu.dot_dimension_numbers<[1], [0], [0], [1], [0, 0, 1, 1], [], []>} : vector<1x16xf32>, vector<16x16xf32>, vector<1x16xf32> -> vector<1x16xf32>
    %cst_79 = arith.constant 0.000000e+00 : f32
    %253 = vector.broadcast %cst_79 : f32 to vector<16x1xf32>
    %254 = arith.cmpf ogt, %251, %253 : vector<16x1xf32>
    %cst_80 = arith.constant 0.000000e+00 : f32
    %255 = vector.broadcast %cst_80 : f32 to vector<1x16xf32>
    %256 = arith.cmpf ogt, %252, %255 : vector<1x16xf32>
    %c16_i32_81 = arith.constant 16 : i32
    %257 = vector.broadcast %c16_i32_81 : i32 to vector<16x1xi32>
    %258 = arith.select %254, %0, %257 : vector<16x1xi1>, vector<16x1xi32>
    %259 = vector.shape_cast %258 : vector<16x1xi32> to vector<1x16x1xi32>
    %cst_82 = arith.constant dense<2147483647> : vector<1xi32>
    %260 = vector.multi_reduction <minsi>, %259, %cst_82 [1, 2] : vector<1x16x1xi32> to vector<1xi32>
    %261 = vector.shape_cast %260 : vector<1xi32> to vector<1x1x1xi32>
    %262 = vector.extract %261[0, 0, 0] : i32 from vector<1x1x1xi32>
    %263 = vector.broadcast %262 : i32 to vector<1x1xi32>
    %c-1_i32_83 = arith.constant -1 : i32
    %264 = vector.broadcast %c-1_i32_83 : i32 to vector<16x1xi32>
    %265 = arith.select %254, %0, %264 : vector<16x1xi1>, vector<16x1xi32>
    %266 = vector.shape_cast %265 : vector<16x1xi32> to vector<1x16x1xi32>
    %cst_84 = arith.constant dense<-2147483648> : vector<1xi32>
    %267 = vector.multi_reduction <maxsi>, %266, %cst_84 [1, 2] : vector<1x16x1xi32> to vector<1xi32>
    %268 = vector.shape_cast %267 : vector<1xi32> to vector<1x1x1xi32>
    %269 = vector.extract %268[0, 0, 0] : i32 from vector<1x1x1xi32>
    %270 = vector.broadcast %269 : i32 to vector<1x1xi32>
    %c16_i32_85 = arith.constant 16 : i32
    %271 = vector.broadcast %c16_i32_85 : i32 to vector<1x16xi32>
    %272 = arith.select %256, %1, %271 : vector<1x16xi1>, vector<1x16xi32>
    %273 = vector.shape_cast %272 : vector<1x16xi32> to vector<1x1x16xi32>
    %cst_86 = arith.constant dense<2147483647> : vector<1xi32>
    %274 = vector.multi_reduction <minsi>, %273, %cst_86 [1, 2] : vector<1x1x16xi32> to vector<1xi32>
    %275 = vector.shape_cast %274 : vector<1xi32> to vector<1x1x1xi32>
    %276 = vector.extract %275[0, 0, 0] : i32 from vector<1x1x1xi32>
    %277 = vector.broadcast %276 : i32 to vector<1x1xi32>
    %c-1_i32_87 = arith.constant -1 : i32
    %278 = vector.broadcast %c-1_i32_87 : i32 to vector<1x16xi32>
    %279 = arith.select %256, %1, %278 : vector<1x16xi1>, vector<1x16xi32>
    %280 = vector.shape_cast %279 : vector<1x16xi32> to vector<1x1x16xi32>
    %cst_88 = arith.constant dense<-2147483648> : vector<1xi32>
    %281 = vector.multi_reduction <maxsi>, %280, %cst_88 [1, 2] : vector<1x1x16xi32> to vector<1xi32>
    %282 = vector.shape_cast %281 : vector<1xi32> to vector<1x1x1xi32>
    %283 = vector.extract %282[0, 0, 0] : i32 from vector<1x1x1xi32>
    %284 = vector.broadcast %283 : i32 to vector<1x1xi32>
    %285 = vector.broadcast %263 : vector<1x1xi32> to vector<16x1xi32>
    %286 = arith.cmpi sge, %0, %285 : vector<16x1xi32>
    %287 = vector.broadcast %270 : vector<1x1xi32> to vector<16x1xi32>
    %288 = arith.cmpi sle, %0, %287 : vector<16x1xi32>
    %289 = arith.andi %286, %288 : vector<16x1xi1>
    %290 = arith.extui %289 : vector<16x1xi1> to vector<16x1xi32>
    %291 = arith.sitofp %290 : vector<16x1xi32> to vector<16x1xf32>
    %292 = vector.broadcast %277 : vector<1x1xi32> to vector<16x1xi32>
    %293 = arith.cmpi sge, %2, %292 : vector<16x1xi32>
    %294 = vector.broadcast %284 : vector<1x1xi32> to vector<16x1xi32>
    %295 = arith.cmpi sle, %2, %294 : vector<16x1xi32>
    %296 = arith.andi %293, %295 : vector<16x1xi1>
    %297 = arith.extui %296 : vector<16x1xi1> to vector<16x1xi32>
    %298 = arith.sitofp %297 : vector<16x1xi32> to vector<16x1xf32>
    %cst_89 = arith.constant dense<0.000000e+00> : vector<16x1xf32>
    %299 = tpu.matmul %246, %298, %cst_89 {dimension_numbers = #tpu.dot_dimension_numbers<[1], [0], [0], [1], [0, 0, 1, 1], [], []>} : vector<16x16xf32>, vector<16x1xf32>, vector<16x1xf32> -> vector<16x1xf32>
    %300 = arith.mulf %291, %299 : vector<16x1xf32>
    %301 = arith.addf %243, %300 : vector<16x1xf32>
    %c4_i32 = arith.constant 4 : i32
    %302 = vector.shape_cast %301 : vector<16x1xf32> to vector<1x16x1xf32>
    %cst_90 = arith.constant dense<0.000000e+00> : vector<1xf32>
    %303 = vector.multi_reduction <add>, %302, %cst_90 [1, 2] : vector<1x16x1xf32> to vector<1xf32>
    %304 = vector.shape_cast %303 : vector<1xf32> to vector<1x1x1xf32>
    %305 = vector.extract %304[0, 0, 0] : f32 from vector<1x1x1xf32>
    %306 = vector.broadcast %305 : f32 to vector<1x1xf32>
    %307 = arith.subf %68, %306 : vector<1x1xf32>
    %c0_91 = arith.constant 0 : index
    %c0_92 = arith.constant 0 : index
    %c0_93 = arith.constant 0 : index
    %308 = vector.load %arg2[%c0_91, %c0_92, %c0_93] : memref<1x1x1xf32, #tpu.memory_space<vmem>>, vector<1x1x1xf32>
    %309 = vector.shape_cast %308 : vector<1x1x1xf32> to vector<1x1xf32>
    %310 = vector.shape_cast %307 : vector<1x1xf32> to vector<1x1x1xf32>
    tpu.vector_store %arg2[%c0_91, %c0_92, %c0_93], %310 {strides = array<i32>} : memref<1x1x1xf32, #tpu.memory_space<vmem>>, vector<1x1x1xf32>,
    return
  }
  func.func @transform_0(%arg0: i32) -> (i32, i32, i32, i32) {
    %c0_i32 = arith.constant 0 : i32
    %c0_i32_0 = arith.constant 0 : i32
    %c0_i32_1 = arith.constant 0 : i32
    %c0_i32_2 = arith.constant 0 : i32
    return %arg0, %c0_i32, %c0_i32_0, %c0_i32_1 : i32, i32, i32, i32
  }
  func.func @transform_1(%arg0: i32) -> (i32, i32, i32) {
    %c0_i32 = arith.constant 0 : i32
    %c0_i32_0 = arith.constant 0 : i32
    %c0_i32_1 = arith.constant 0 : i32
    return %arg0, %c0_i32, %c0_i32_0 : i32, i32, i32
  }
}

</mosaic_0001>

<llo_original>
// kernel: tpu_custom_call.1
$region0: #{tpu_custom_call.1}
  #allocation0 [shape = 'u32[]', space=smem, size = 0x4, offset = 0x4, fixed_abs, tag = 'smem constant byte address 0x4 - core index']
  #allocation1 [shape = 'u32[144,128]{1,0:T(1,128)}', space=vmem, size = 0x12000, scoped, tag = 'internal scratch']
  %s0 = inlined_call_operand.hbm [shape: f32[2,4,16,16], index: 0, kind: input, shape index: {}]
  %s1 = inlined_call_operand.vmem [shape: f32[2,1,1], index: 1, kind: output, shape index: {}]
  %s2 = sld [smem:[#allocation0]]
  $region41: #{tpu_custom_call.1} parent=0
    _
  %s4 = ssub.s32 1, %s2
  %s5 = scalar_select 0, %s4, %s2
  $region1: #{tpu_custom_call.1} parent=0
    #allocation2 [shape = 'u8[65536]{0}', space=vmem, size = 0x10000, scoped, tag = 'input window, operand 0']
    #allocation3 [shape = 's32[2]{0}', space=sflag, size = 0x8, scoped, tag = 'scoped memory for tpu_custom_call.1']
    %6 = vsyncpa [#allocation3], 0
    %s7 = scalar_lea.sflag [#allocation3], 1
    %8 = vsyncpa %s7, 0
    loop: start=0, step=1, limit=4
    $region2: #{tpu_custom_call.1} parent=1 // loop_pre_header
      _
    $region3: #{tpu_custom_call.1} parent=1 // loop_header
      %s10 = sphi 0, %s14
      %p11 = scmp.ge.s32.totalorder %s10, 4
      %s20 = sphi 0, %s22
      %s23 = sphi 0, %s20
      %s24 = sphi 0, %s23
      %s40 = sphi 0, %s24
      %s46 = sphi 0, %s48
      %s49 = sphi 0, %s46
      %s50 = sphi 0, %s49
      %s66 = sphi 0, %s50
    $region4: #{tpu_custom_call.1} parent=1 // loop_header_branch
      %13 = sbr.rel (%p11) target = $region8
    $region5: #{tpu_custom_call.1} parent=1 // loop_body
      %s15 = ssub.s32 %s10, 1
      %s16 = ssub.s32 %s10, 2
      %s17 = sadd.s32 %s10, 1
      %s18 = ssub.s32 %s10, %s17
      %p19 = scmp.eq.s32.totalorder %s18, 0
      %s21 = sadd.s32 %s20, 1
      %s22 = scalar_select %p19, %s20, %s21
      %p25 = pneg %p19
      %p26 = scmp.eq.s32.totalorder %s10, 1
      %p27 = por %p25, %p26
      %p28 = scmp.ne.s32.totalorder %s20, %s23
      %p29 = scmp.eq.s32.totalorder %s10, 0
      %p30 = por %p28, %p29
      %p31 = scmp.ne.s32.totalorder %s20, %s23
      %p32 = scmp.eq.s32.totalorder %s15, 1
      %p33 = por %p31, %p32
      %p34 = scmp.ne.s32.totalorder %s23, %s24
      %p35 = scmp.eq.s32.totalorder %s15, 0
      %p36 = por %p34, %p35
      %p37 = scmp.ne.s32.totalorder %s23, %s24
      %p38 = scmp.eq.s32.totalorder %s16, 1
      %p39 = por %p37, %p38
      %p41 = scmp.ne.s32.totalorder %s24, %s40
      %p42 = scmp.eq.s32.totalorder %s16, 0
      %p43 = por %p41, %p42
      %s44 = ssub.s32 %s10, %s17
      %p45 = scmp.eq.s32.totalorder %s44, 0
      %s47 = sadd.s32 %s46, 1
      %s48 = scalar_select %p45, %s46, %s47
      %p51 = pneg %p45
      %p52 = scmp.eq.s32.totalorder %s10, 1
      %p53 = por %p51, %p52
      %p54 = scmp.ne.s32.totalorder %s46, %s49
      %p55 = scmp.eq.s32.totalorder %s10, 0
      %p56 = por %p54, %p55
      %p57 = scmp.ne.s32.totalorder %s46, %s49
      %p58 = scmp.eq.s32.totalorder %s15, 1
      %p59 = por %p57, %p58
      %p60 = scmp.ne.s32.totalorder %s49, %s50
      %p61 = scmp.eq.s32.totalorder %s15, 0
      %p62 = por %p60, %p61
      %p63 = scmp.ne.s32.totalorder %s49, %s50
      %p64 = scmp.eq.s32.totalorder %s16, 1
      %p65 = por %p63, %p64
      %p67 = scmp.ne.s32.totalorder %s50, %s66
      %p68 = scmp.eq.s32.totalorder %s16, 0
      %p69 = por %p67, %p68
      %p70 = scmp.le.s32.totalorder 1, %s10
      %p71 = scmp.lt.s32.totalorder %s10, 3
      %p72 = pnand %p70, %p71
      %p73 = pneg %p72
      // Predicated region
      $region9: #{tpu_custom_call.1} parent=5 // pred_check
        _
      $region10: #{tpu_custom_call.1} parent=5 // pred_check_branch
        %75 = sbr.rel (%p72) target = $region12
      $region11: #{tpu_custom_call.1} parent=5 // pred_region
        %s76 = ssub.s32 %s10, 1
      $region12: #{tpu_custom_call.1} parent=5 // pred_fallthru
        _
      %p77 = scmp.lt.s32.totalorder %s10, 2
      // Predicated region
      $region13: #{tpu_custom_call.1} parent=5 // pred_check
        %p78 = pneg %p77
      $region14: #{tpu_custom_call.1} parent=5 // pred_check_branch
        %80 = sbr.rel (%p78) target = $region16
      $region15: #{tpu_custom_call.1} parent=5 // pred_region
        // Predicated region
        $region17: #{tpu_custom_call.1} parent=15 // pred_check
          %p81 = pneg %p30
        $region18: #{tpu_custom_call.1} parent=15 // pred_check_branch
          %83 = sbr.rel (%p81) target = $region20
        $region19: #{tpu_custom_call.1} parent=15 // pred_region
          %s84 = sand.u32 %s20, 1
          %s85 = scalar_lea.sflag [#allocation3], %s84
          %s86 = sand.u32 %s20, 1
          %s87 = smul.addr %s86, 64
          %s88 = scalar_lea.vmem [#allocation2], %s87
          %s90 = ssub.s32 1024, 1024
          %91 = vsyncadd %s85, %s90
          %s92 = smul.addr %s10, 8
          %s93 = smul.addr %s92, 128
          %s94 = scalar_lea.hbm %s0, %s93
          %s95 = sshll.u32 %s88, 4
          %s96 = int_to_ptr.vmem [resolvable:$true] %s95
          %101 = dma.hbm_to_vmem [thread:$0]  %s94, 1024, %s96, %s85, 128, 128, 8
        $region20: #{tpu_custom_call.1} parent=15 // pred_fallthru
          _
      $region16: #{tpu_custom_call.1} parent=5 // pred_fallthru
        _
      %p102 = scmp.le.s32.totalorder 1, %s10
      %p103 = scmp.lt.s32.totalorder %s10, 3
      %p104 = pnand %p102, %p103
      %p105 = pneg %p104
      // Predicated region
      $region21: #{tpu_custom_call.1} parent=5 // pred_check
        _
      $region22: #{tpu_custom_call.1} parent=5 // pred_check_branch
        %107 = sbr.rel (%p104) target = $region24
      $region23: #{tpu_custom_call.1} parent=5 // pred_region
        %s108 = ssub.s32 %s10, 1
        %s109 = sand.u32 %s23, 1
        %s110 = scalar_lea.sflag [#allocation3], %s109
        %s111 = sand.u32 %s23, 1
        %s112 = smul.addr %s111, 64
        %s113 = scalar_lea.vmem [#allocation2], %s112
        // Predicated region
        $region25: #{tpu_custom_call.1} parent=23 // pred_check
          %p114 = pneg %p36
        $region26: #{tpu_custom_call.1} parent=23 // pred_check_branch
          %116 = sbr.rel (%p114) target = $region28
        $region27: #{tpu_custom_call.1} parent=23 // pred_region
          %117 = dma.done %s110, 1024
        $region28: #{tpu_custom_call.1} parent=23 // pred_fallthru
          _
        %s118 = sand.u32 %s23, 1
        %s119 = scalar_lea.sflag [#allocation3], %s118
        %s120 = sand.u32 %s23, 1
        %s121 = smul.addr %s120, 64
        %s122 = scalar_lea.vmem [#allocation2], %s121
        %p123 = pneg %p36
        %p124 = pneg %p33
        %p125 = pneg %p62
        %p126 = pneg %p59
        %p127 = scmp.lt.s32.totalorder %s15, 1
        %s128 = scalar_select %p127, %s15, 1
        %s129 = scalar_lea.vmem %s1, %s128
        %p130 = scmp.lt.s32.totalorder %s15, 1
        %s131 = scalar_select %p130, %s15, 1
        %s132 = scalar_lea.vmem %s1, %s131
        %v133 = vlaneseq
        %v134 = vshrl.u32 %v133, 7
        %v135 = vadd.s32 %v134, 8
        %v136 = vlaneseq
        %v137 = vand.u32 %v136, 127
        %v138 = vld [vmem:[%s113] sm:$0xff]
        %v139 = vld [vmem:[%s113 + $0x8] sm:$0xff]
        %v140 = vmax.f32 %v138, 0.0
        %v141 = vmax.f32 %v139, 0.0
        %v142 = vand.u32 2147483647, %v138
        %v143 = vand.u32 2147483647, %v139
        %v144 = vsub.f32 0.0, %v142
        %v145 = vsub.f32 0.0, %v143
        %v146 = vmul.f32 %v144, 1.442695
        %v147 = vpow.pop %v146
        %v148 = vmul.f32 %v145, 1.442695
        %v149 = vpow.pop %v148
        %v150 = vadd.f32 %v147, 1.0
        %v151 = vlog2.pop %v150
        %v152 = vmul.f32 %v151, 0.6931472
        %v153 = vmul.f32 -0.5, %v147
        %v154 = vadd.f32 %v153, 1.0
        %v155 = vmul.f32 %v154, %v147
        %v156 = vand.u32 2147483647, %v147
        %vm157 = vcmp.lt.f32.partialorder %v156, 0.0004427343
        %v158 = vsel %vm157, %v155, %v152
        %v159 = vadd.f32 %v149, 1.0
        %v160 = vlog2.pop %v159
        %v161 = vmul.f32 %v160, 0.6931472
        %v162 = vmul.f32 -0.5, %v149
        %v163 = vadd.f32 %v162, 1.0
        %v164 = vmul.f32 %v163, %v149
        %v165 = vand.u32 2147483647, %v149
        %vm166 = vcmp.lt.f32.partialorder %v165, 0.0004427343
        %v167 = vsel %vm166, %v164, %v161
        %v168 = vadd.f32 %v140, %v158
        %v169 = vadd.f32 %v141, %v167
        %s170 = scalar_lea.vmem %s113, 16 [#allocation2]
        %v171 = vld [vmem:[%s170] sm:$0xff]
        %v172 = vld [vmem:[%s170 + $0x8] sm:$0xff]
        %vm173 = vcmp.gt.f32.partialorder %v171, %v138
        %vm174 = vcmp.gt.f32.partialorder %v172, %v139
        %v175 = vsel %vm173, %v171, %v138
        %v176 = vsel %vm174, %v172, %v139
        %v177 = vsel %vm173, 1, 0
        %v178 = vsel %vm174, 1, 0
        %v179 = vmax.f32 %v171, 0.0
        %v180 = vmax.f32 %v172, 0.0
        %v181 = vand.u32 2147483647, %v171
        %v182 = vand.u32 2147483647, %v172
        %v183 = vsub.f32 0.0, %v181
        %v184 = vsub.f32 0.0, %v182
        %v185 = vmul.f32 %v183, 1.442695
        %v186 = vpow.pop %v185
        %v187 = vmul.f32 %v184, 1.442695
        %v188 = vpow.pop %v187
        %v189 = vadd.f32 %v186, 1.0
        %v190 = vlog2.pop %v189
        %v191 = vmul.f32 %v190, 0.6931472
        %v192 = vmul.f32 -0.5, %v186
        %v193 = vadd.f32 %v192, 1.0
        %v194 = vmul.f32 %v193, %v186
        %v195 = vand.u32 2147483647, %v186
        %vm196 = vcmp.lt.f32.partialorder %v195, 0.0004427343
        %v197 = vsel %vm196, %v194, %v191
        %v198 = vadd.f32 %v188, 1.0
        %v199 = vlog2.pop %v198
        %v200 = vmul.f32 %v199, 0.6931472
        %v201 = vmul.f32 -0.5, %v188
        %v202 = vadd.f32 %v201, 1.0
        %v203 = vmul.f32 %v202, %v188
        %v204 = vand.u32 2147483647, %v188
        %vm205 = vcmp.lt.f32.partialorder %v204, 0.0004427343
        %v206 = vsel %vm205, %v203, %v200
        %v207 = vadd.f32 %v179, %v197
        %v208 = vadd.f32 %v180, %v206
        %v209 = vadd.f32 %v168, %v207
        %v210 = vadd.f32 %v169, %v208
        %s211 = scalar_lea.vmem %s113, 32 [#allocation2]
        %v212 = vld [vmem:[%s211] sm:$0xff]
        %v213 = vld [vmem:[%s211 + $0x8] sm:$0xff]
        %vm214 = vcmp.gt.f32.partialorder %v212, %v175
        %vm215 = vcmp.gt.f32.partialorder %v213, %v176
        %v216 = vsel %vm214, %v212, %v175
        %v217 = vsel %vm215, %v213, %v176
        %v218 = vsel %vm214, 2, %v177
        %v219 = vsel %vm215, 2, %v178
        %v220 = vmax.f32 %v212, 0.0
        %v221 = vmax.f32 %v213, 0.0
        %v222 = vand.u32 2147483647, %v212
        %v223 = vand.u32 2147483647, %v213
        %v224 = vsub.f32 0.0, %v222
        %v225 = vsub.f32 0.0, %v223
        %v226 = vmul.f32 %v224, 1.442695
        %v227 = vpow.pop %v226
        %v228 = vmul.f32 %v225, 1.442695
        %v229 = vpow.pop %v228
        %v230 = vadd.f32 %v227, 1.0
        %v231 = vlog2.pop %v230
        %v232 = vmul.f32 %v231, 0.6931472
        %v233 = vmul.f32 -0.5, %v227
        %v234 = vadd.f32 %v233, 1.0
        %v235 = vmul.f32 %v234, %v227
        %v236 = vand.u32 2147483647, %v227
        %vm237 = vcmp.lt.f32.partialorder %v236, 0.0004427343
        %v238 = vsel %vm237, %v235, %v232
        %v239 = vadd.f32 %v229, 1.0
        %v240 = vlog2.pop %v239
        %v241 = vmul.f32 %v240, 0.6931472
        %v242 = vmul.f32 -0.5, %v229
        %v243 = vadd.f32 %v242, 1.0
        %v244 = vmul.f32 %v243, %v229
        %v245 = vand.u32 2147483647, %v229
        %vm246 = vcmp.lt.f32.partialorder %v245, 0.0004427343
        %v247 = vsel %vm246, %v244, %v241
        %v248 = vadd.f32 %v220, %v238
        %v249 = vadd.f32 %v221, %v247
        %v250 = vadd.f32 %v209, %v248
        %v251 = vadd.f32 %v210, %v249
        %s252 = scalar_lea.vmem %s113, 48 [#allocation2]
        %v253 = vld [vmem:[%s252] sm:$0xff]
        %v254 = vld [vmem:[%s252 + $0x8] sm:$0xff]
        %vm255 = vcmp.gt.f32.partialorder %v253, %v216
        %vm256 = vcmp.gt.f32.partialorder %v254, %v217
        %v257 = vsel %vm255, 3, %v218
        %v258 = vsel %vm256, 3, %v219
        %v259 = vmax.f32 %v253, 0.0
        %v260 = vmax.f32 %v254, 0.0
        %v261 = vand.u32 2147483647, %v253
        %v262 = vand.u32 2147483647, %v254
        %v263 = vsub.f32 0.0, %v261
        %v264 = vsub.f32 0.0, %v262
        %v265 = vmul.f32 %v263, 1.442695
        %v266 = vpow.pop %v265
        %v267 = vmul.f32 %v264, 1.442695
        %v268 = vpow.pop %v267
        %v269 = vadd.f32 %v266, 1.0
        %v270 = vlog2.pop %v269
        %v271 = vmul.f32 %v270, 0.6931472
        %v272 = vmul.f32 -0.5, %v266
        %v273 = vadd.f32 %v272, 1.0
        %v274 = vmul.f32 %v273, %v266
        %v275 = vand.u32 2147483647, %v266
        %vm276 = vcmp.lt.f32.partialorder %v275, 0.0004427343
        %v277 = vsel %vm276, %v274, %v271
        %v278 = vadd.f32 %v268, 1.0
        %v279 = vlog2.pop %v278
        %v280 = vmul.f32 %v279, 0.6931472
        %v281 = vmul.f32 -0.5, %v268
        %v282 = vadd.f32 %v281, 1.0
        %v283 = vmul.f32 %v282, %v268
        %v284 = vand.u32 2147483647, %v268
        %vm285 = vcmp.lt.f32.partialorder %v284, 0.0004427343
        %v286 = vsel %vm285, %v283, %v280
        %v287 = vadd.f32 %v259, %v277
        %v288 = vadd.f32 %v260, %v286
        %v289 = vadd.f32 %v250, %v287
        %v290 = vadd.f32 %v251, %v288
        %vm291 = vcmask 130048
        %v292 = vsel %vm291, %v289, 0.0
        %v293 = vsel %vm291, %v290, 0.0
        %v294 = vadd.f32 %v292, %v293
        %295 = vadd.xlane.f32.xlu0 %v294
        %v296 = vpop.xlane.xlu0 %295
        %v297 = vrot.slane %v296, 4
        %v298 = vadd.f32 %v296, %v297
        %v299 = vrot.slane %v298, 2
        %v300 = vadd.f32 %v298, %v299
        %v301 = vrot.slane %v300, 1
        %v302 = vadd.f32 %v300, %v301
        %s303 = vtos %v302
        %v304 = vstv %s303
        %vm305 = vcmp.eq.s32.totalorder %v257, 0
        %vm306 = vcmp.eq.s32.totalorder %v258, 0
        %v307 = vsel %vm305, 1, 0
        %v308 = vsel %vm306, 1, 0
        %v309 = vcvt.s32.f32 %v307
        %v310 = vcvt.s32.f32 %v308
        %v312 = vsel %vm291, %v309, 0
        %v315 = vsel %vm291, %v310, 0
        %317 = vmatprep.subr.mxu0 0.0
        %318 = vmatpush1.msra.mxu0 1.0
        %319 = vmatprep.subr.mxu0 0.0
        %320 = vmatpush1.msra.mxu0 1.0
        %321 = vmatprep.subr.mxu0 0.0
        %322 = vmatpush1.msra.mxu0 0.0
        %323 = vmatprep.subr.mxu0 0.0
        %324 = vmatpush1.msra.mxu0 0.0
        %325 = vmatprep.subr.mxu0 0.0
        %326 = vmatpush1.msra.mxu0 0.0
        %327 = vmatprep.subr.mxu0 0.0
        %328 = vmatpush1.msra.mxu0 0.0
        %329 = vmatprep.subr.mxu0 0.0
        %330 = vmatpush1.msra.mxu0 0.0
        %331 = vmatprep.subr.mxu0 0.0
        %332 = vmatpush1.msra.mxu0 0.0
        %333 = vmatprep.subr.mxu0 0.0
        %334 = vmatpush1.msra.mxu0 0.0
        %335 = vmatprep.subr.mxu0 0.0
        %336 = vmatpush1.msra.mxu0 0.0
        %337 = vmatprep.subr.mxu0 0.0
        %338 = vmatpush1.msra.mxu0 0.0
        %339 = vmatprep.subr.mxu0 0.0
        %340 = vmatpush1.msra.mxu0 0.0
        %341 = vmatprep.subr.mxu0 0.0
        %342 = vmatpush1.msra.mxu0 0.0
        %343 = vmatprep.subr.mxu0 0.0
        %344 = vmatpush1.msra.mxu0 0.0
        %345 = vmatprep.subr.mxu0 0.0
        %346 = vmatpush1.msra.mxu0 0.0
        %347 = vmatprep.subr.mxu0 0.0
        %348 = vmatpush1.msra.mxu0 0.0
        %349 = vmatprep.subr.mxu0 0.0
        %350 = vmatpush1.msra.mxu0 0.0
        %351 = vmatprep.subr.mxu0 0.0
        %352 = vmatpush1.msra.mxu0 0.0
        %353 = vmatprep.subr.mxu0 0.0
        %354 = vmatpush1.msra.mxu0 0.0
        %355 = vmatprep.subr.mxu0 0.0
        %356 = vmatpush1.msra.mxu0 0.0
        %357 = vmatprep.subr.mxu0 0.0
        %358 = vmatpush1.msra.mxu0 0.0
        %359 = vmatprep.subr.mxu0 0.0
        %360 = vmatpush1.msra.mxu0 0.0
        %361 = vmatprep.subr.mxu0 0.0
        %362 = vmatpush1.msra.mxu0 0.0
        %363 = vmatprep.subr.mxu0 0.0
        %364 = vmatpush1.msra.mxu0 0.0
        %365 = vmatprep.subr.mxu0 0.0
        %366 = vmatpush1.msra.mxu0 0.0
        %367 = vmatprep.subr.mxu0 0.0
        %368 = vmatpush1.msra.mxu0 0.0
        %369 = vmatprep.subr.mxu0 0.0
        %370 = vmatpush1.msra.mxu0 0.0
        %371 = vmatprep.subr.mxu0 0.0
        %372 = vmatpush1.msra.mxu0 0.0
        %373 = vmatprep.subr.mxu0 0.0
        %374 = vmatpush1.msra.mxu0 0.0
        %375 = vmatprep.subr.mxu0 0.0
        %376 = vmatpush1.msra.mxu0 0.0
        %377 = vmatprep.subr.mxu0 0.0
        %378 = vmatpush1.msra.mxu0 0.0
        %379 = vmatprep.subr.mxu0 0.0
        %380 = vmatpush1.msra.mxu0 0.0
        %381 = vmatprep.mubr.f32.mxu0 0.0
        %382 = vmatmul.mubr.f32.gmra.mrb[0].mxu0 %v312
        %v383 = vpop.f32.mrb[0].mxu0
        %v384 = vadd.f32 0.0, %v383
        %v385 = vpop.f32.mrb[0].mxu0
        %386 = vmatprep.mubr.f32.mxu0 0.0
        %387 = vmatmul.mubr.f32.gmra.mrb[0].mxu0 %v315
        %v388 = vpop.f32.mrb[0].mxu0
        %v389 = vadd.f32 0.0, %v388
        %v390 = vpop.f32.mrb[0].mxu0
        %391 = vdwg.mxu0
        %v393 = vsel %vm291, 1.0, 0
        %395 = vmatprep.subr.mxu0 0.0
        %396 = vmatpush1.msra.mxu0 %v309
        %397 = vmatprep.subr.mxu0 0.0
        %398 = vmatpush1.msra.mxu0 %v310
        %399 = vmatprep.subr.mxu0 0.0
        %400 = vmatpush1.msra.mxu0 0.0
        %401 = vmatprep.subr.mxu0 0.0
        %402 = vmatpush1.msra.mxu0 0.0
        %403 = vmatprep.subr.mxu0 0.0
        %404 = vmatpush1.msra.mxu0 0.0
        %405 = vmatprep.subr.mxu0 0.0
        %406 = vmatpush1.msra.mxu0 0.0
        %407 = vmatprep.subr.mxu0 0.0
        %408 = vmatpush1.msra.mxu0 0.0
        %409 = vmatprep.subr.mxu0 0.0
        %410 = vmatpush1.msra.mxu0 0.0
        %411 = vmatprep.subr.mxu0 0.0
        %412 = vmatpush1.msra.mxu0 0.0
        %413 = vmatprep.subr.mxu0 0.0
        %414 = vmatpush1.msra.mxu0 0.0
        %415 = vmatprep.subr.mxu0 0.0
        %416 = vmatpush1.msra.mxu0 0.0
        %417 = vmatprep.subr.mxu0 0.0
        %418 = vmatpush1.msra.mxu0 0.0
        %419 = vmatprep.subr.mxu0 0.0
        %420 = vmatpush1.msra.mxu0 0.0
        %421 = vmatprep.subr.mxu0 0.0
        %422 = vmatpush1.msra.mxu0 0.0
        %423 = vmatprep.subr.mxu0 0.0
        %424 = vmatpush1.msra.mxu0 0.0
        %425 = vmatprep.subr.mxu0 0.0
        %426 = vmatpush1.msra.mxu0 0.0
        %427 = vmatprep.subr.mxu0 0.0
        %428 = vmatpush1.msra.mxu0 0.0
        %429 = vmatprep.subr.mxu0 0.0
        %430 = vmatpush1.msra.mxu0 0.0
        %431 = vmatprep.subr.mxu0 0.0
        %432 = vmatpush1.msra.mxu0 0.0
        %433 = vmatprep.subr.mxu0 0.0
        %434 = vmatpush1.msra.mxu0 0.0
        %435 = vmatprep.subr.mxu0 0.0
        %436 = vmatpush1.msra.mxu0 0.0
        %437 = vmatprep.subr.mxu0 0.0
        %438 = vmatpush1.msra.mxu0 0.0
        %439 = vmatprep.subr.mxu0 0.0
        %440 = vmatpush1.msra.mxu0 0.0
        %441 = vmatprep.subr.mxu0 0.0
        %442 = vmatpush1.msra.mxu0 0.0
        %443 = vmatprep.subr.mxu0 0.0
        %444 = vmatpush1.msra.mxu0 0.0
        %445 = vmatprep.subr.mxu0 0.0
        %446 = vmatpush1.msra.mxu0 0.0
        %447 = vmatprep.subr.mxu0 0.0
        %448 = vmatpush1.msra.mxu0 0.0
        %449 = vmatprep.subr.mxu0 0.0
        %450 = vmatpush1.msra.mxu0 0.0
        %451 = vmatprep.subr.mxu0 0.0
        %452 = vmatpush1.msra.mxu0 0.0
        %453 = vmatprep.subr.mxu0 0.0
        %454 = vmatpush1.msra.mxu0 0.0
        %455 = vmatprep.subr.mxu0 0.0
        %456 = vmatpush1.msra.mxu0 0.0
        %457 = vmatprep.subr.mxu0 0.0
        %458 = vmatpush1.msra.mxu0 0.0
        %459 = vmatprep.mubr.f32.mxu0 0.0
        %460 = vmatmul.mubr.f32.gmra.mrb[0].mxu0 %v393
        %v461 = vpop.f32.mrb[0].mxu0
        %v462 = vadd.f32 0.0, %v461
        %v463 = vpop.f32.mrb[0].mxu0
        %464 = vdwg.mxu0
        %vm465 = vcmp.gt.f32.partialorder %v384, 0.0
        %vm466 = vcmp.gt.f32.partialorder %v389, 0.0
        %vm467 = vcmp.gt.f32.partialorder %v462, 0.0
        %v468 = vsel %vm465, %v134, 16
        %v469 = vsel %vm466, %v135, 16
        %vm470 = vcmask 7168
        %v471 = vsel %vm470, %v468, 2147483647
        %v472 = vsel %vm470, %v469, 2147483647
        %vm473 = vcmp.lt.s32.totalorder %v471, %v472
        %v474 = vsel %vm473, %v471, %v472
        %v475 = vand.u32 %v474, 65535
        %v476 = vshra.s32 %v474, 16
        %v477 = vcvt.s32.f32 %v475
        %v478 = vcvt.s32.f32 %v476
        %479 = vmin.xlane.f32.xlu0 %v478
        %v480 = vpop.xlane.xlu0 %479
        %vm481 = vcmp.eq.f32.partialorder %v478, %v480
        %v482 = vsel %vm481, %v477, inf
        %483 = vmin.xlane.f32.xlu0 %v482
        %v484 = vpop.xlane.xlu0 %483
        %v485 = vcvt.f32.s32 %v484
        %v486 = vcvt.f32.s32 %v480
        %v487 = vshll.u32 %v486, 16
        %v488 = vadd.s32 %v487, %v485
        %v489 = vrot.slane %v488, 4
        %vm490 = vcmp.lt.s32.totalorder %v488, %v489
        %v491 = vsel %vm490, %v488, %v489
        %v492 = vrot.slane %v491, 2
        %vm493 = vcmp.lt.s32.totalorder %v491, %v492
        %v494 = vsel %vm493, %v491, %v492
        %v495 = vrot.slane %v494, 1
        %vm496 = vcmp.lt.s32.totalorder %v494, %v495
        %v497 = vsel %vm496, %v494, %v495
        %s498 = vtos %v497
        %v499 = vsel %vm465, %v134, 4294967295
        %v500 = vsel %vm466, %v135, 4294967295
        %v501 = vsel %vm470, %v499, 2147483648
        %v502 = vsel %vm470, %v500, 2147483648
        %vm503 = vcmp.gt.s32.totalorder %v501, %v502
        %v504 = vsel %vm503, %v501, %v502
        %v505 = vand.u32 %v504, 65535
        %v506 = vshra.s32 %v504, 16
        %v507 = vcvt.s32.f32 %v505
        %v508 = vcvt.s32.f32 %v506
        %509 = vmax.xlane.f32.xlu0 %v508
        %v510 = vpop.xlane.xlu0 %509
        %vm511 = vcmp.eq.f32.partialorder %v508, %v510
        %v512 = vsel %vm511, %v507, -inf
        %513 = vmax.xlane.f32.xlu0 %v512
        %v514 = vpop.xlane.xlu0 %513
        %v515 = vcvt.f32.s32 %v514
        %v516 = vcvt.f32.s32 %v510
        %v517 = vshll.u32 %v516, 16
        %v518 = vadd.s32 %v517, %v515
        %v519 = vrot.slane %v518, 4
        %vm520 = vcmp.gt.s32.totalorder %v518, %v519
        %v521 = vsel %vm520, %v518, %v519
        %v522 = vrot.slane %v521, 2
        %vm523 = vcmp.gt.s32.totalorder %v521, %v522
        %v524 = vsel %vm523, %v521, %v522
        %v525 = vrot.slane %v524, 1
        %vm526 = vcmp.gt.s32.totalorder %v524, %v525
        %v527 = vsel %vm526, %v524, %v525
        %s528 = vtos %v527
        %v529 = vsel %vm467, %v137, 16
        %vm530 = vcmask 122880
        %v531 = vsel %vm530, %v529, 2147483647
        %v532 = vand.u32 %v531, 65535
        %v533 = vshra.s32 %v531, 16
        %v534 = vcvt.s32.f32 %v532
        %v535 = vcvt.s32.f32 %v533
        %536 = vmin.xlane.f32.xlu0 %v535
        %v537 = vpop.xlane.xlu0 %536
        %vm538 = vcmp.eq.f32.partialorder %v535, %v537
        %v539 = vsel %vm538, %v534, inf
        %540 = vmin.xlane.f32.xlu0 %v539
        %v541 = vpop.xlane.xlu0 %540
        %v542 = vcvt.f32.s32 %v541
        %v543 = vcvt.f32.s32 %v537
        %v544 = vshll.u32 %v543, 16
        %v545 = vadd.s32 %v544, %v542
        %v546 = vrot.slane %v545, 4
        %vm547 = vcmp.lt.s32.totalorder %v545, %v546
        %v548 = vsel %vm547, %v545, %v546
        %v549 = vrot.slane %v548, 2
        %vm550 = vcmp.lt.s32.totalorder %v548, %v549
        %v551 = vsel %vm550, %v548, %v549
        %v552 = vrot.slane %v551, 1
        %vm553 = vcmp.lt.s32.totalorder %v551, %v552
        %v554 = vsel %vm553, %v551, %v552
        %s555 = vtos %v554
        %v556 = vsel %vm467, %v137, 4294967295
        %v557 = vsel %vm530, %v556, 2147483648
        %v558 = vand.u32 %v557, 65535
        %v559 = vshra.s32 %v557, 16
        %v560 = vcvt.s32.f32 %v558
        %v561 = vcvt.s32.f32 %v559
        %562 = vmax.xlane.f32.xlu0 %v561
        %v563 = vpop.xlane.xlu0 %562
        %vm564 = vcmp.eq.f32.partialorder %v561, %v563
        %v565 = vsel %vm564, %v560, -inf
        %566 = vmax.xlane.f32.xlu0 %v565
        %v567 = vpop.xlane.xlu0 %566
        %v568 = vcvt.f32.s32 %v567
        %v569 = vcvt.f32.s32 %v563
        %v570 = vshll.u32 %v569, 16
        %v571 = vadd.s32 %v570, %v568
        %v572 = vrot.slane %v571, 4
        %vm573 = vcmp.gt.s32.totalorder %v571, %v572
        %v574 = vsel %vm573, %v571, %v572
        %v575 = vrot.slane %v574, 2
        %vm576 = vcmp.gt.s32.totalorder %v574, %v575
        %v577 = vsel %vm576, %v574, %v575
        %v578 = vrot.slane %v577, 1
        %vm579 = vcmp.gt.s32.totalorder %v577, %v578
        %v580 = vsel %vm579, %v577, %v578
        %s581 = vtos %v580
        %v582 = vstv %s498
        %vm583 = vcmp.ge.s32.totalorder %v134, %v582
        %vm584 = vcmp.ge.s32.totalorder %v135, %v582
        %v585 = vstv %s528
        %vm586 = vcmp.le.s32.totalorder %v134, %v585
        %vm587 = vcmp.le.s32.totalorder %v135, %v585
        %vm588 = vmand %vm583, %vm586
        %vm589 = vmand %vm584, %vm587
        %v590 = vsel %vm588, 1, 0
        %v591 = vsel %vm589, 1, 0
        %v592 = vcvt.s32.f32 %v590
        %v593 = vcvt.s32.f32 %v591
        %v594 = vstv %s555
        %vm595 = vcmp.ge.s32.totalorder %v134, %v594
        %vm596 = vcmp.ge.s32.totalorder %v135, %v594
        %v597 = vstv %s581
        %vm598 = vcmp.le.s32.totalorder %v134, %v597
        %vm599 = vcmp.le.s32.totalorder %v135, %v597
        %vm600 = vmand %vm595, %vm598
        %vm601 = vmand %vm596, %vm599
        %v602 = vsel %vm600, 1, 0
        %v603 = vsel %vm601, 1, 0
        %v604 = vcvt.s32.f32 %v602
        %v605 = vcvt.s32.f32 %v603
        %v607 = vsel %vm291, %v138, 0
        %v610 = vsel %vm291, %v139, 0
        %612 = vmatprep.subr.mxu0 0.0
        %613 = vmatpush1.msra.mxu0 %v604
        %614 = vmatprep.subr.mxu0 0.0
        %615 = vmatpush1.msra.mxu0 %v605
        %616 = vmatprep.subr.mxu0 0.0
        %617 = vmatpush1.msra.mxu0 0.0
        %618 = vmatprep.subr.mxu0 0.0
        %619 = vmatpush1.msra.mxu0 0.0
        %620 = vmatprep.subr.mxu0 0.0
        %621 = vmatpush1.msra.mxu0 0.0
        %622 = vmatprep.subr.mxu0 0.0
        %623 = vmatpush1.msra.mxu0 0.0
        %624 = vmatprep.subr.mxu0 0.0
        %625 = vmatpush1.msra.mxu0 0.0
        %626 = vmatprep.subr.mxu0 0.0
        %627 = vmatpush1.msra.mxu0 0.0
        %628 = vmatprep.subr.mxu0 0.0
        %629 = vmatpush1.msra.mxu0 0.0
        %630 = vmatprep.subr.mxu0 0.0
        %631 = vmatpush1.msra.mxu0 0.0
        %632 = vmatprep.subr.mxu0 0.0
        %633 = vmatpush1.msra.mxu0 0.0
        %634 = vmatprep.subr.mxu0 0.0
        %635 = vmatpush1.msra.mxu0 0.0
        %636 = vmatprep.subr.mxu0 0.0
        %637 = vmatpush1.msra.mxu0 0.0
        %638 = vmatprep.subr.mxu0 0.0
        %639 = vmatpush1.msra.mxu0 0.0
        %640 = vmatprep.subr.mxu0 0.0
        %641 = vmatpush1.msra.mxu0 0.0
        %642 = vmatprep.subr.mxu0 0.0
        %643 = vmatpush1.msra.mxu0 0.0
        %644 = vmatprep.subr.mxu0 0.0
        %645 = vmatpush1.msra.mxu0 0.0
        %646 = vmatprep.subr.mxu0 0.0
        %647 = vmatpush1.msra.mxu0 0.0
        %648 = vmatprep.subr.mxu0 0.0
        %649 = vmatpush1.msra.mxu0 0.0
        %650 = vmatprep.subr.mxu0 0.0
        %651 = vmatpush1.msra.mxu0 0.0
        %652 = vmatprep.subr.mxu0 0.0
        %653 = vmatpush1.msra.mxu0 0.0
        %654 = vmatprep.subr.mxu0 0.0
        %655 = vmatpush1.msra.mxu0 0.0
        %656 = vmatprep.subr.mxu0 0.0
        %657 = vmatpush1.msra.mxu0 0.0
        %658 = vmatprep.subr.mxu0 0.0
        %659 = vmatpush1.msra.mxu0 0.0
        %660 = vmatprep.subr.mxu0 0.0
        %661 = vmatpush1.msra.mxu0 0.0
        %662 = vmatprep.subr.mxu0 0.0
        %663 = vmatpush1.msra.mxu0 0.0
        %664 = vmatprep.subr.mxu0 0.0
        %665 = vmatpush1.msra.mxu0 0.0
        %666 = vmatprep.subr.mxu0 0.0
        %667 = vmatpush1.msra.mxu0 0.0
        %668 = vmatprep.subr.mxu0 0.0
        %669 = vmatpush1.msra.mxu0 0.0
        %670 = vmatprep.subr.mxu0 0.0
        %671 = vmatpush1.msra.mxu0 0.0
        %672 = vmatprep.subr.mxu0 0.0
        %673 = vmatpush1.msra.mxu0 0.0
        %674 = vmatprep.subr.mxu0 0.0
        %675 = vmatpush1.msra.mxu0 0.0
        %676 = vmatprep.mubr.f32.mxu0 0.0
        %677 = vmatmul.mubr.f32.gmra.mrb[0].mxu0 %v607
        %v678 = vpop.f32.mrb[0].mxu0
        %v679 = vadd.f32 0.0, %v678
        %v680 = vpop.f32.mrb[0].mxu0
        %681 = vmatprep.mubr.f32.mxu0 0.0
        %682 = vmatmul.mubr.f32.gmra.mrb[0].mxu0 %v610
        %v683 = vpop.f32.mrb[0].mxu0
        %v684 = vadd.f32 0.0, %v683
        %v685 = vpop.f32.mrb[0].mxu0
        %686 = vdwg.mxu0
        %v687 = vmul.f32 %v592, %v679
        %v688 = vmul.f32 %v593, %v684
        %v689 = vadd.f32 %v687, 0.0
        %v690 = vadd.f32 %v688, 0.0
        %vm691 = vcmp.eq.s32.totalorder %v257, 1
        %vm692 = vcmp.eq.s32.totalorder %v258, 1
        %v693 = vsel %vm691, 1, 0
        %v694 = vsel %vm692, 1, 0
        %v695 = vcvt.s32.f32 %v693
        %v696 = vcvt.s32.f32 %v694
        %v698 = vsel %vm291, %v695, 0
        %v701 = vsel %vm291, %v696, 0
        %703 = vmatprep.subr.mxu0 0.0
        %704 = vmatpush1.msra.mxu0 1.0
        %705 = vmatprep.subr.mxu0 0.0
        %706 = vmatpush1.msra.mxu0 1.0
        %707 = vmatprep.subr.mxu0 0.0
        %708 = vmatpush1.msra.mxu0 0.0
        %709 = vmatprep.subr.mxu0 0.0
        %710 = vmatpush1.msra.mxu0 0.0
        %711 = vmatprep.subr.mxu0 0.0
        %712 = vmatpush1.msra.mxu0 0.0
        %713 = vmatprep.subr.mxu0 0.0
        %714 = vmatpush1.msra.mxu0 0.0
        %715 = vmatprep.subr.mxu0 0.0
        %716 = vmatpush1.msra.mxu0 0.0
        %717 = vmatprep.subr.mxu0 0.0
        %718 = vmatpush1.msra.mxu0 0.0
        %719 = vmatprep.subr.mxu0 0.0
        %720 = vmatpush1.msra.mxu0 0.0
        %721 = vmatprep.subr.mxu0 0.0
        %722 = vmatpush1.msra.mxu0 0.0
        %723 = vmatprep.subr.mxu0 0.0
        %724 = vmatpush1.msra.mxu0 0.0
        %725 = vmatprep.subr.mxu0 0.0
        %726 = vmatpush1.msra.mxu0 0.0
        %727 = vmatprep.subr.mxu0 0.0
        %728 = vmatpush1.msra.mxu0 0.0
        %729 = vmatprep.subr.mxu0 0.0
        %730 = vmatpush1.msra.mxu0 0.0
        %731 = vmatprep.subr.mxu0 0.0
        %732 = vmatpush1.msra.mxu0 0.0
        %733 = vmatprep.subr.mxu0 0.0
        %734 = vmatpush1.msra.mxu0 0.0
        %735 = vmatprep.subr.mxu0 0.0
        %736 = vmatpush1.msra.mxu0 0.0
        %737 = vmatprep.subr.mxu0 0.0
        %738 = vmatpush1.msra.mxu0 0.0
        %739 = vmatprep.subr.mxu0 0.0
        %740 = vmatpush1.msra.mxu0 0.0
        %741 = vmatprep.subr.mxu0 0.0
        %742 = vmatpush1.msra.mxu0 0.0
        %743 = vmatprep.subr.mxu0 0.0
        %744 = vmatpush1.msra.mxu0 0.0
        %745 = vmatprep.subr.mxu0 0.0
        %746 = vmatpush1.msra.mxu0 0.0
        %747 = vmatprep.subr.mxu0 0.0
        %748 = vmatpush1.msra.mxu0 0.0
        %749 = vmatprep.subr.mxu0 0.0
        %750 = vmatpush1.msra.mxu0 0.0
        %751 = vmatprep.subr.mxu0 0.0
        %752 = vmatpush1.msra.mxu0 0.0
        %753 = vmatprep.subr.mxu0 0.0
        %754 = vmatpush1.msra.mxu0 0.0
        %755 = vmatprep.subr.mxu0 0.0
        %756 = vmatpush1.msra.mxu0 0.0
        %757 = vmatprep.subr.mxu0 0.0
        %758 = vmatpush1.msra.mxu0 0.0
        %759 = vmatprep.subr.mxu0 0.0
        %760 = vmatpush1.msra.mxu0 0.0
        %761 = vmatprep.subr.mxu0 0.0
        %762 = vmatpush1.msra.mxu0 0.0
        %763 = vmatprep.subr.mxu0 0.0
        %764 = vmatpush1.msra.mxu0 0.0
        %765 = vmatprep.subr.mxu0 0.0
        %766 = vmatpush1.msra.mxu0 0.0
        %767 = vmatprep.mubr.f32.mxu0 0.0
        %768 = vmatmul.mubr.f32.gmra.mrb[0].mxu0 %v698
        %v769 = vpop.f32.mrb[0].mxu0
        %v770 = vadd.f32 0.0, %v769
        %v771 = vpop.f32.mrb[0].mxu0
        %772 = vmatprep.mubr.f32.mxu0 0.0
        %773 = vmatmul.mubr.f32.gmra.mrb[0].mxu0 %v701
        %v774 = vpop.f32.mrb[0].mxu0
        %v775 = vadd.f32 0.0, %v774
        %v776 = vpop.f32.mrb[0].mxu0
        %777 = vdwg.mxu0
        %778 = vmatprep.subr.mxu0 0.0
        %779 = vmatpush1.msra.mxu0 %v695
        %780 = vmatprep.subr.mxu0 0.0
        %781 = vmatpush1.msra.mxu0 %v696
        %782 = vmatprep.subr.mxu0 0.0
        %783 = vmatpush1.msra.mxu0 0.0
        %784 = vmatprep.subr.mxu0 0.0
        %785 = vmatpush1.msra.mxu0 0.0
        %786 = vmatprep.subr.mxu0 0.0
        %787 = vmatpush1.msra.mxu0 0.0
        %788 = vmatprep.subr.mxu0 0.0
        %789 = vmatpush1.msra.mxu0 0.0
        %790 = vmatprep.subr.mxu0 0.0
        %791 = vmatpush1.msra.mxu0 0.0
        %792 = vmatprep.subr.mxu0 0.0
        %793 = vmatpush1.msra.mxu0 0.0
        %794 = vmatprep.subr.mxu0 0.0
        %795 = vmatpush1.msra.mxu0 0.0
        %796 = vmatprep.subr.mxu0 0.0
        %797 = vmatpush1.msra.mxu0 0.0
        %798 = vmatprep.subr.mxu0 0.0
        %799 = vmatpush1.msra.mxu0 0.0
        %800 = vmatprep.subr.mxu0 0.0
        %801 = vmatpush1.msra.mxu0 0.0
        %802 = vmatprep.subr.mxu0 0.0
        %803 = vmatpush1.msra.mxu0 0.0
        %804 = vmatprep.subr.mxu0 0.0
        %805 = vmatpush1.msra.mxu0 0.0
        %806 = vmatprep.subr.mxu0 0.0
        %807 = vmatpush1.msra.mxu0 0.0
        %808 = vmatprep.subr.mxu0 0.0
        %809 = vmatpush1.msra.mxu0 0.0
        %810 = vmatprep.subr.mxu0 0.0
        %811 = vmatpush1.msra.mxu0 0.0
        %812 = vmatprep.subr.mxu0 0.0
        %813 = vmatpush1.msra.mxu0 0.0
        %814 = vmatprep.subr.mxu0 0.0
        %815 = vmatpush1.msra.mxu0 0.0
        %816 = vmatprep.subr.mxu0 0.0
        %817 = vmatpush1.msra.mxu0 0.0
        %818 = vmatprep.subr.mxu0 0.0
        %819 = vmatpush1.msra.mxu0 0.0
        %820 = vmatprep.subr.mxu0 0.0
        %821 = vmatpush1.msra.mxu0 0.0
        %822 = vmatprep.subr.mxu0 0.0
        %823 = vmatpush1.msra.mxu0 0.0
        %824 = vmatprep.subr.mxu0 0.0
        %825 = vmatpush1.msra.mxu0 0.0
        %826 = vmatprep.subr.mxu0 0.0
        %827 = vmatpush1.msra.mxu0 0.0
        %828 = vmatprep.subr.mxu0 0.0
        %829 = vmatpush1.msra.mxu0 0.0
        %830 = vmatprep.subr.mxu0 0.0
        %831 = vmatpush1.msra.mxu0 0.0
        %832 = vmatprep.subr.mxu0 0.0
        %833 = vmatpush1.msra.mxu0 0.0
        %834 = vmatprep.subr.mxu0 0.0
        %835 = vmatpush1.msra.mxu0 0.0
        %836 = vmatprep.subr.mxu0 0.0
        %837 = vmatpush1.msra.mxu0 0.0
        %838 = vmatprep.subr.mxu0 0.0
        %839 = vmatpush1.msra.mxu0 0.0
        %840 = vmatprep.subr.mxu0 0.0
        %841 = vmatpush1.msra.mxu0 0.0
        %842 = vmatprep.mubr.f32.mxu0 0.0
        %843 = vmatmul.mubr.f32.gmra.mrb[0].mxu0 %v393
        %v844 = vpop.f32.mrb[0].mxu0
        %v845 = vadd.f32 0.0, %v844
        %v846 = vpop.f32.mrb[0].mxu0
        %847 = vdwg.mxu0
        %vm848 = vcmp.gt.f32.partialorder %v770, 0.0
        %vm849 = vcmp.gt.f32.partialorder %v775, 0.0
        %vm850 = vcmp.gt.f32.partialorder %v845, 0.0
        %v851 = vsel %vm848, %v134, 16
        %v852 = vsel %vm849, %v135, 16
        %v853 = vsel %vm470, %v851, 2147483647
        %v854 = vsel %vm470, %v852, 2147483647
        %vm855 = vcmp.lt.s32.totalorder %v853, %v854
        %v856 = vsel %vm855, %v853, %v854
        %v857 = vand.u32 %v856, 65535
        %v858 = vshra.s32 %v856, 16
        %v859 = vcvt.s32.f32 %v857
        %v860 = vcvt.s32.f32 %v858
        %861 = vmin.xlane.f32.xlu0 %v860
        %v862 = vpop.xlane.xlu0 %861
        %vm863 = vcmp.eq.f32.partialorder %v860, %v862
        %v864 = vsel %vm863, %v859, inf
        %865 = vmin.xlane.f32.xlu0 %v864
        %v866 = vpop.xlane.xlu0 %865
        %v867 = vcvt.f32.s32 %v866
        %v868 = vcvt.f32.s32 %v862
        %v869 = vshll.u32 %v868, 16
        %v870 = vadd.s32 %v869, %v867
        %v871 = vrot.slane %v870, 4
        %vm872 = vcmp.lt.s32.totalorder %v870, %v871
        %v873 = vsel %vm872, %v870, %v871
        %v874 = vrot.slane %v873, 2
        %vm875 = vcmp.lt.s32.totalorder %v873, %v874
        %v876 = vsel %vm875, %v873, %v874
        %v877 = vrot.slane %v876, 1
        %vm878 = vcmp.lt.s32.totalorder %v876, %v877
        %v879 = vsel %vm878, %v876, %v877
        %s880 = vtos %v879
        %v881 = vsel %vm848, %v134, 4294967295
        %v882 = vsel %vm849, %v135, 4294967295
        %v883 = vsel %vm470, %v881, 2147483648
        %v884 = vsel %vm470, %v882, 2147483648
        %vm885 = vcmp.gt.s32.totalorder %v883, %v884
        %v886 = vsel %vm885, %v883, %v884
        %v887 = vand.u32 %v886, 65535
        %v888 = vshra.s32 %v886, 16
        %v889 = vcvt.s32.f32 %v887
        %v890 = vcvt.s32.f32 %v888
        %891 = vmax.xlane.f32.xlu0 %v890
        %v892 = vpop.xlane.xlu0 %891
        %vm893 = vcmp.eq.f32.partialorder %v890, %v892
        %v894 = vsel %vm893, %v889, -inf
        %895 = vmax.xlane.f32.xlu0 %v894
        %v896 = vpop.xlane.xlu0 %895
        %v897 = vcvt.f32.s32 %v896
        %v898 = vcvt.f32.s32 %v892
        %v899 = vshll.u32 %v898, 16
        %v900 = vadd.s32 %v899, %v897
        %v901 = vrot.slane %v900, 4
        %vm902 = vcmp.gt.s32.totalorder %v900, %v901
        %v903 = vsel %vm902, %v900, %v901
        %v904 = vrot.slane %v903, 2
        %vm905 = vcmp.gt.s32.totalorder %v903, %v904
        %v906 = vsel %vm905, %v903, %v904
        %v907 = vrot.slane %v906, 1
        %vm908 = vcmp.gt.s32.totalorder %v906, %v907
        %v909 = vsel %vm908, %v906, %v907
        %s910 = vtos %v909
        %v911 = vsel %vm850, %v137, 16
        %v912 = vsel %vm530, %v911, 2147483647
        %v913 = vand.u32 %v912, 65535
        %v914 = vshra.s32 %v912, 16
        %v915 = vcvt.s32.f32 %v913
        %v916 = vcvt.s32.f32 %v914
        %917 = vmin.xlane.f32.xlu0 %v916
        %v918 = vpop.xlane.xlu0 %917
        %vm919 = vcmp.eq.f32.partialorder %v916, %v918
        %v920 = vsel %vm919, %v915, inf
        %921 = vmin.xlane.f32.xlu0 %v920
        %v922 = vpop.xlane.xlu0 %921
        %v923 = vcvt.f32.s32 %v922
        %v924 = vcvt.f32.s32 %v918
        %v925 = vshll.u32 %v924, 16
        %v926 = vadd.s32 %v925, %v923
        %v927 = vrot.slane %v926, 4
        %vm928 = vcmp.lt.s32.totalorder %v926, %v927
        %v929 = vsel %vm928, %v926, %v927
        %v930 = vrot.slane %v929, 2
        %vm931 = vcmp.lt.s32.totalorder %v929, %v930
        %v932 = vsel %vm931, %v929, %v930
        %v933 = vrot.slane %v932, 1
        %vm934 = vcmp.lt.s32.totalorder %v932, %v933
        %v935 = vsel %vm934, %v932, %v933
        %s936 = vtos %v935
        %v937 = vsel %vm850, %v137, 4294967295
        %v938 = vsel %vm530, %v937, 2147483648
        %v939 = vand.u32 %v938, 65535
        %v940 = vshra.s32 %v938, 16
        %v941 = vcvt.s32.f32 %v939
        %v942 = vcvt.s32.f32 %v940
        %943 = vmax.xlane.f32.xlu0 %v942
        %v944 = vpop.xlane.xlu0 %943
        %vm945 = vcmp.eq.f32.partialorder %v942, %v944
        %v946 = vsel %vm945, %v941, -inf
        %947 = vmax.xlane.f32.xlu0 %v946
        %v948 = vpop.xlane.xlu0 %947
        %v949 = vcvt.f32.s32 %v948
        %v950 = vcvt.f32.s32 %v944
        %v951 = vshll.u32 %v950, 16
        %v952 = vadd.s32 %v951, %v949
        %v953 = vrot.slane %v952, 4
        %vm954 = vcmp.gt.s32.totalorder %v952, %v953
        %v955 = vsel %vm954, %v952, %v953
        %v956 = vrot.slane %v955, 2
        %vm957 = vcmp.gt.s32.totalorder %v955, %v956
        %v958 = vsel %vm957, %v955, %v956
        %v959 = vrot.slane %v958, 1
        %vm960 = vcmp.gt.s32.totalorder %v958, %v959
        %v961 = vsel %vm960, %v958, %v959
        %s962 = vtos %v961
        %v963 = vstv %s880
        %vm964 = vcmp.ge.s32.totalorder %v134, %v963
        %vm965 = vcmp.ge.s32.totalorder %v135, %v963
        %v966 = vstv %s910
        %vm967 = vcmp.le.s32.totalorder %v134, %v966
        %vm968 = vcmp.le.s32.totalorder %v135, %v966
        %vm969 = vmand %vm964, %vm967
        %vm970 = vmand %vm965, %vm968
        %v971 = vsel %vm969, 1, 0
        %v972 = vsel %vm970, 1, 0
        %v973 = vcvt.s32.f32 %v971
        %v974 = vcvt.s32.f32 %v972
        %v975 = vstv %s936
        %vm976 = vcmp.ge.s32.totalorder %v134, %v975
        %vm977 = vcmp.ge.s32.totalorder %v135, %v975
        %v978 = vstv %s962
        %vm979 = vcmp.le.s32.totalorder %v134, %v978
        %vm980 = vcmp.le.s32.totalorder %v135, %v978
        %vm981 = vmand %vm976, %vm979
        %vm982 = vmand %vm977, %vm980
        %v983 = vsel %vm981, 1, 0
        %v984 = vsel %vm982, 1, 0
        %v985 = vcvt.s32.f32 %v983
        %v986 = vcvt.s32.f32 %v984
        %v988 = vsel %vm291, %v171, 0
        %v991 = vsel %vm291, %v172, 0
        %993 = vmatprep.subr.mxu0 0.0
        %994 = vmatpush1.msra.mxu0 %v985
        %995 = vmatprep.subr.mxu0 0.0
        %996 = vmatpush1.msra.mxu0 %v986
        %997 = vmatprep.subr.mxu0 0.0
        %998 = vmatpush1.msra.mxu0 0.0
        %999 = vmatprep.subr.mxu0 0.0
        %1000 = vmatpush1.msra.mxu0 0.0
        %1001 = vmatprep.subr.mxu0 0.0
        %1002 = vmatpush1.msra.mxu0 0.0
        %1003 = vmatprep.subr.mxu0 0.0
        %1004 = vmatpush1.msra.mxu0 0.0
        %1005 = vmatprep.subr.mxu0 0.0
        %1006 = vmatpush1.msra.mxu0 0.0
        %1007 = vmatprep.subr.mxu0 0.0
        %1008 = vmatpush1.msra.mxu0 0.0
        %1009 = vmatprep.subr.mxu0 0.0
        %1010 = vmatpush1.msra.mxu0 0.0
        %1011 = vmatprep.subr.mxu0 0.0
        %1012 = vmatpush1.msra.mxu0 0.0
        %1013 = vmatprep.subr.mxu0 0.0
        %1014 = vmatpush1.msra.mxu0 0.0
        %1015 = vmatprep.subr.mxu0 0.0
        %1016 = vmatpush1.msra.mxu0 0.0
        %1017 = vmatprep.subr.mxu0 0.0
        %1018 = vmatpush1.msra.mxu0 0.0
        %1019 = vmatprep.subr.mxu0 0.0
        %1020 = vmatpush1.msra.mxu0 0.0
        %1021 = vmatprep.subr.mxu0 0.0
        %1022 = vmatpush1.msra.mxu0 0.0
        %1023 = vmatprep.subr.mxu0 0.0
        %1024 = vmatpush1.msra.mxu0 0.0
        %1025 = vmatprep.subr.mxu0 0.0
        %1026 = vmatpush1.msra.mxu0 0.0
        %1027 = vmatprep.subr.mxu0 0.0
        %1028 = vmatpush1.msra.mxu0 0.0
        %1029 = vmatprep.subr.mxu0 0.0
        %1030 = vmatpush1.msra.mxu0 0.0
        %1031 = vmatprep.subr.mxu0 0.0
        %1032 = vmatpush1.msra.mxu0 0.0
        %1033 = vmatprep.subr.mxu0 0.0
        %1034 = vmatpush1.msra.mxu0 0.0
        %1035 = vmatprep.subr.mxu0 0.0
        %1036 = vmatpush1.msra.mxu0 0.0
        %1037 = vmatprep.subr.mxu0 0.0
        %1038 = vmatpush1.msra.mxu0 0.0
        %1039 = vmatprep.subr.mxu0 0.0
        %1040 = vmatpush1.msra.mxu0 0.0
        %1041 = vmatprep.subr.mxu0 0.0
        %1042 = vmatpush1.msra.mxu0 0.0
        %1043 = vmatprep.subr.mxu0 0.0
        %1044 = vmatpush1.msra.mxu0 0.0
        %1045 = vmatprep.subr.mxu0 0.0
        %1046 = vmatpush1.msra.mxu0 0.0
        %1047 = vmatprep.subr.mxu0 0.0
        %1048 = vmatpush1.msra.mxu0 0.0
        %1049 = vmatprep.subr.mxu0 0.0
        %1050 = vmatpush1.msra.mxu0 0.0
        %1051 = vmatprep.subr.mxu0 0.0
        %1052 = vmatpush1.msra.mxu0 0.0
        %1053 = vmatprep.subr.mxu0 0.0
        %1054 = vmatpush1.msra.mxu0 0.0
        %1055 = vmatprep.subr.mxu0 0.0
        %1056 = vmatpush1.msra.mxu0 0.0
        %1057 = vmatprep.mubr.f32.mxu0 0.0
        %1058 = vmatmul.mubr.f32.gmra.mrb[0].mxu0 %v988
        %v1059 = vpop.f32.mrb[0].mxu0
        %v1060 = vadd.f32 0.0, %v1059
        %v1061 = vpop.f32.mrb[0].mxu0
        %1062 = vmatprep.mubr.f32.mxu0 0.0
        %1063 = vmatmul.mubr.f32.gmra.mrb[0].mxu0 %v991
        %v1064 = vpop.f32.mrb[0].mxu0
        %v1065 = vadd.f32 0.0, %v1064
        %v1066 = vpop.f32.mrb[0].mxu0
        %1067 = vdwg.mxu0
        %v1068 = vmul.f32 %v973, %v1060
        %v1069 = vmul.f32 %v974, %v1065
        %v1070 = vadd.f32 %v689, %v1068
        %v1071 = vadd.f32 %v690, %v1069
        %vm1072 = vcmp.eq.s32.totalorder %v257, 2
        %vm1073 = vcmp.eq.s32.totalorder %v258, 2
        %v1074 = vsel %vm1072, 1, 0
        %v1075 = vsel %vm1073, 1, 0
        %v1076 = vcvt.s32.f32 %v1074
        %v1077 = vcvt.s32.f32 %v1075
        %v1079 = vsel %vm291, %v1076, 0
        %v1082 = vsel %vm291, %v1077, 0
        %1084 = vmatprep.subr.mxu0 0.0
        %1085 = vmatpush1.msra.mxu0 1.0
        %1086 = vmatprep.subr.mxu0 0.0
        %1087 = vmatpush1.msra.mxu0 1.0
        %1088 = vmatprep.subr.mxu0 0.0
        %1089 = vmatpush1.msra.mxu0 0.0
        %1090 = vmatprep.subr.mxu0 0.0
        %1091 = vmatpush1.msra.mxu0 0.0
        %1092 = vmatprep.subr.mxu0 0.0
        %1093 = vmatpush1.msra.mxu0 0.0
        %1094 = vmatprep.subr.mxu0 0.0
        %1095 = vmatpush1.msra.mxu0 0.0
        %1096 = vmatprep.subr.mxu0 0.0
        %1097 = vmatpush1.msra.mxu0 0.0
        %1098 = vmatprep.subr.mxu0 0.0
        %1099 = vmatpush1.msra.mxu0 0.0
        %1100 = vmatprep.subr.mxu0 0.0
        %1101 = vmatpush1.msra.mxu0 0.0
        %1102 = vmatprep.subr.mxu0 0.0
        %1103 = vmatpush1.msra.mxu0 0.0
        %1104 = vmatprep.subr.mxu0 0.0
        %1105 = vmatpush1.msra.mxu0 0.0
        %1106 = vmatprep.subr.mxu0 0.0
        %1107 = vmatpush1.msra.mxu0 0.0
        %1108 = vmatprep.subr.mxu0 0.0
        %1109 = vmatpush1.msra.mxu0 0.0
        %1110 = vmatprep.subr.mxu0 0.0
        %1111 = vmatpush1.msra.mxu0 0.0
        %1112 = vmatprep.subr.mxu0 0.0
        %1113 = vmatpush1.msra.mxu0 0.0
        %1114 = vmatprep.subr.mxu0 0.0
        %1115 = vmatpush1.msra.mxu0 0.0
        %1116 = vmatprep.subr.mxu0 0.0
        %1117 = vmatpush1.msra.mxu0 0.0
        %1118 = vmatprep.subr.mxu0 0.0
        %1119 = vmatpush1.msra.mxu0 0.0
        %1120 = vmatprep.subr.mxu0 0.0
        %1121 = vmatpush1.msra.mxu0 0.0
        %1122 = vmatprep.subr.mxu0 0.0
        %1123 = vmatpush1.msra.mxu0 0.0
        %1124 = vmatprep.subr.mxu0 0.0
        %1125 = vmatpush1.msra.mxu0 0.0
        %1126 = vmatprep.subr.mxu0 0.0
        %1127 = vmatpush1.msra.mxu0 0.0
        %1128 = vmatprep.subr.mxu0 0.0
        %1129 = vmatpush1.msra.mxu0 0.0
        %1130 = vmatprep.subr.mxu0 0.0
        %1131 = vmatpush1.msra.mxu0 0.0
        %1132 = vmatprep.subr.mxu0 0.0
        %1133 = vmatpush1.msra.mxu0 0.0
        %1134 = vmatprep.subr.mxu0 0.0
        %1135 = vmatpush1.msra.mxu0 0.0
        %1136 = vmatprep.subr.mxu0 0.0
        %1137 = vmatpush1.msra.mxu0 0.0
        %1138 = vmatprep.subr.mxu0 0.0
        %1139 = vmatpush1.msra.mxu0 0.0
        %1140 = vmatprep.subr.mxu0 0.0
        %1141 = vmatpush1.msra.mxu0 0.0
        %1142 = vmatprep.subr.mxu0 0.0
        %1143 = vmatpush1.msra.mxu0 0.0
        %1144 = vmatprep.subr.mxu0 0.0
        %1145 = vmatpush1.msra.mxu0 0.0
        %1146 = vmatprep.subr.mxu0 0.0
        %1147 = vmatpush1.msra.mxu0 0.0
        %1148 = vmatprep.mubr.f32.mxu0 0.0
        %1149 = vmatmul.mubr.f32.gmra.mrb[0].mxu0 %v1079
        %v1150 = vpop.f32.mrb[0].mxu0
        %v1151 = vadd.f32 0.0, %v1150
        %v1152 = vpop.f32.mrb[0].mxu0
        %1153 = vmatprep.mubr.f32.mxu0 0.0
        %1154 = vmatmul.mubr.f32.gmra.mrb[0].mxu0 %v1082
        %v1155 = vpop.f32.mrb[0].mxu0
        %v1156 = vadd.f32 0.0, %v1155
        %v1157 = vpop.f32.mrb[0].mxu0
        %1158 = vdwg.mxu0
        %1159 = vmatprep.subr.mxu0 0.0
        %1160 = vmatpush1.msra.mxu0 %v1076
        %1161 = vmatprep.subr.mxu0 0.0
        %1162 = vmatpush1.msra.mxu0 %v1077
        %1163 = vmatprep.subr.mxu0 0.0
        %1164 = vmatpush1.msra.mxu0 0.0
        %1165 = vmatprep.subr.mxu0 0.0
        %1166 = vmatpush1.msra.mxu0 0.0
        %1167 = vmatprep.subr.mxu0 0.0
        %1168 = vmatpush1.msra.mxu0 0.0
        %1169 = vmatprep.subr.mxu0 0.0
        %1170 = vmatpush1.msra.mxu0 0.0
        %1171 = vmatprep.subr.mxu0 0.0
        %1172 = vmatpush1.msra.mxu0 0.0
        %1173 = vmatprep.subr.mxu0 0.0
        %1174 = vmatpush1.msra.mxu0 0.0
        %1175 = vmatprep.subr.mxu0 0.0
        %1176 = vmatpush1.msra.mxu0 0.0
        %1177 = vmatprep.subr.mxu0 0.0
        %1178 = vmatpush1.msra.mxu0 0.0
        %1179 = vmatprep.subr.mxu0 0.0
        %1180 = vmatpush1.msra.mxu0 0.0
        %1181 = vmatprep.subr.mxu0 0.0
        %1182 = vmatpush1.msra.mxu0 0.0
        %1183 = vmatprep.subr.mxu0 0.0
        %1184 = vmatpush1.msra.mxu0 0.0
        %1185 = vmatprep.subr.mxu0 0.0
        %1186 = vmatpush1.msra.mxu0 0.0
        %1187 = vmatprep.subr.mxu0 0.0
        %1188 = vmatpush1.msra.mxu0 0.0
        %1189 = vmatprep.subr.mxu0 0.0
        %1190 = vmatpush1.msra.mxu0 0.0
        %1191 = vmatprep.subr.mxu0 0.0
        %1192 = vmatpush1.msra.mxu0 0.0
        %1193 = vmatprep.subr.mxu0 0.0
        %1194 = vmatpush1.msra.mxu0 0.0
        %1195 = vmatprep.subr.mxu0 0.0
        %1196 = vmatpush1.msra.mxu0 0.0
        %1197 = vmatprep.subr.mxu0 0.0
        %1198 = vmatpush1.msra.mxu0 0.0
        %1199 = vmatprep.subr.mxu0 0.0
        %1200 = vmatpush1.msra.mxu0 0.0
        %1201 = vmatprep.subr.mxu0 0.0
        %1202 = vmatpush1.msra.mxu0 0.0
        %1203 = vmatprep.subr.mxu0 0.0
        %1204 = vmatpush1.msra.mxu0 0.0
        %1205 = vmatprep.subr.mxu0 0.0
        %1206 = vmatpush1.msra.mxu0 0.0
        %1207 = vmatprep.subr.mxu0 0.0
        %1208 = vmatpush1.msra.mxu0 0.0
        %1209 = vmatprep.subr.mxu0 0.0
        %1210 = vmatpush1.msra.mxu0 0.0
        %1211 = vmatprep.subr.mxu0 0.0
        %1212 = vmatpush1.msra.mxu0 0.0
        %1213 = vmatprep.subr.mxu0 0.0
        %1214 = vmatpush1.msra.mxu0 0.0
        %1215 = vmatprep.subr.mxu0 0.0
        %1216 = vmatpush1.msra.mxu0 0.0
        %1217 = vmatprep.subr.mxu0 0.0
        %1218 = vmatpush1.msra.mxu0 0.0
        %1219 = vmatprep.subr.mxu0 0.0
        %1220 = vmatpush1.msra.mxu0 0.0
        %1221 = vmatprep.subr.mxu0 0.0
        %1222 = vmatpush1.msra.mxu0 0.0
        %1223 = vmatprep.mubr.f32.mxu0 0.0
        %1224 = vmatmul.mubr.f32.gmra.mrb[0].mxu0 %v393
        %v1225 = vpop.f32.mrb[0].mxu0
        %v1226 = vadd.f32 0.0, %v1225
        %v1227 = vpop.f32.mrb[0].mxu0
        %1228 = vdwg.mxu0
        %vm1229 = vcmp.gt.f32.partialorder %v1151, 0.0
        %vm1230 = vcmp.gt.f32.partialorder %v1156, 0.0
        %vm1231 = vcmp.gt.f32.partialorder %v1226, 0.0
        %v1232 = vsel %vm1229, %v134, 16
        %v1233 = vsel %vm1230, %v135, 16
        %v1234 = vsel %vm470, %v1232, 2147483647
        %v1235 = vsel %vm470, %v1233, 2147483647
        %vm1236 = vcmp.lt.s32.totalorder %v1234, %v1235
        %v1237 = vsel %vm1236, %v1234, %v1235
        %v1238 = vand.u32 %v1237, 65535
        %v1239 = vshra.s32 %v1237, 16
        %v1240 = vcvt.s32.f32 %v1238
        %v1241 = vcvt.s32.f32 %v1239
        %1242 = vmin.xlane.f32.xlu0 %v1241
        %v1243 = vpop.xlane.xlu0 %1242
        %vm1244 = vcmp.eq.f32.partialorder %v1241, %v1243
        %v1245 = vsel %vm1244, %v1240, inf
        %1246 = vmin.xlane.f32.xlu0 %v1245
        %v1247 = vpop.xlane.xlu0 %1246
        %v1248 = vcvt.f32.s32 %v1247
        %v1249 = vcvt.f32.s32 %v1243
        %v1250 = vshll.u32 %v1249, 16
        %v1251 = vadd.s32 %v1250, %v1248
        %v1252 = vrot.slane %v1251, 4
        %vm1253 = vcmp.lt.s32.totalorder %v1251, %v1252
        %v1254 = vsel %vm1253, %v1251, %v1252
        %v1255 = vrot.slane %v1254, 2
        %vm1256 = vcmp.lt.s32.totalorder %v1254, %v1255
        %v1257 = vsel %vm1256, %v1254, %v1255
        %v1258 = vrot.slane %v1257, 1
        %vm1259 = vcmp.lt.s32.totalorder %v1257, %v1258
        %v1260 = vsel %vm1259, %v1257, %v1258
        %s1261 = vtos %v1260
        %v1262 = vsel %vm1229, %v134, 4294967295
        %v1263 = vsel %vm1230, %v135, 4294967295
        %v1264 = vsel %vm470, %v1262, 2147483648
        %v1265 = vsel %vm470, %v1263, 2147483648
        %vm1266 = vcmp.gt.s32.totalorder %v1264, %v1265
        %v1267 = vsel %vm1266, %v1264, %v1265
        %v1268 = vand.u32 %v1267, 65535
        %v1269 = vshra.s32 %v1267, 16
        %v1270 = vcvt.s32.f32 %v1268
        %v1271 = vcvt.s32.f32 %v1269
        %1272 = vmax.xlane.f32.xlu0 %v1271
        %v1273 = vpop.xlane.xlu0 %1272
        %vm1274 = vcmp.eq.f32.partialorder %v1271, %v1273
        %v1275 = vsel %vm1274, %v1270, -inf
        %1276 = vmax.xlane.f32.xlu0 %v1275
        %v1277 = vpop.xlane.xlu0 %1276
        %v1278 = vcvt.f32.s32 %v1277
        %v1279 = vcvt.f32.s32 %v1273
        %v1280 = vshll.u32 %v1279, 16
        %v1281 = vadd.s32 %v1280, %v1278
        %v1282 = vrot.slane %v1281, 4
        %vm1283 = vcmp.gt.s32.totalorder %v1281, %v1282
        %v1284 = vsel %vm1283, %v1281, %v1282
        %v1285 = vrot.slane %v1284, 2
        %vm1286 = vcmp.gt.s32.totalorder %v1284, %v1285
        %v1287 = vsel %vm1286, %v1284, %v1285
        %v1288 = vrot.slane %v1287, 1
        %vm1289 = vcmp.gt.s32.totalorder %v1287, %v1288
        %v1290 = vsel %vm1289, %v1287, %v1288
        %s1291 = vtos %v1290
        %v1292 = vsel %vm1231, %v137, 16
        %v1293 = vsel %vm530, %v1292, 2147483647
        %v1294 = vand.u32 %v1293, 65535
        %v1295 = vshra.s32 %v1293, 16
        %v1296 = vcvt.s32.f32 %v1294
        %v1297 = vcvt.s32.f32 %v1295
        %1298 = vmin.xlane.f32.xlu0 %v1297
        %v1299 = vpop.xlane.xlu0 %1298
        %vm1300 = vcmp.eq.f32.partialorder %v1297, %v1299
        %v1301 = vsel %vm1300, %v1296, inf
        %1302 = vmin.xlane.f32.xlu0 %v1301
        %v1303 = vpop.xlane.xlu0 %1302
        %v1304 = vcvt.f32.s32 %v1303
        %v1305 = vcvt.f32.s32 %v1299
        %v1306 = vshll.u32 %v1305, 16
        %v1307 = vadd.s32 %v1306, %v1304
        %v1308 = vrot.slane %v1307, 4
        %vm1309 = vcmp.lt.s32.totalorder %v1307, %v1308
        %v1310 = vsel %vm1309, %v1307, %v1308
        %v1311 = vrot.slane %v1310, 2
        %vm1312 = vcmp.lt.s32.totalorder %v1310, %v1311
        %v1313 = vsel %vm1312, %v1310, %v1311
        %v1314 = vrot.slane %v1313, 1
        %vm1315 = vcmp.lt.s32.totalorder %v1313, %v1314
        %v1316 = vsel %vm1315, %v1313, %v1314
        %s1317 = vtos %v1316
        %v1318 = vsel %vm1231, %v137, 4294967295
        %v1319 = vsel %vm530, %v1318, 2147483648
        %v1320 = vand.u32 %v1319, 65535
        %v1321 = vshra.s32 %v1319, 16
        %v1322 = vcvt.s32.f32 %v1320
        %v1323 = vcvt.s32.f32 %v1321
        %1324 = vmax.xlane.f32.xlu0 %v1323
        %v1325 = vpop.xlane.xlu0 %1324
        %vm1326 = vcmp.eq.f32.partialorder %v1323, %v1325
        %v1327 = vsel %vm1326, %v1322, -inf
        %1328 = vmax.xlane.f32.xlu0 %v1327
        %v1329 = vpop.xlane.xlu0 %1328
        %v1330 = vcvt.f32.s32 %v1329
        %v1331 = vcvt.f32.s32 %v1325
        %v1332 = vshll.u32 %v1331, 16
        %v1333 = vadd.s32 %v1332, %v1330
        %v1334 = vrot.slane %v1333, 4
        %vm1335 = vcmp.gt.s32.totalorder %v1333, %v1334
        %v1336 = vsel %vm1335, %v1333, %v1334
        %v1337 = vrot.slane %v1336, 2
        %vm1338 = vcmp.gt.s32.totalorder %v1336, %v1337
        %v1339 = vsel %vm1338, %v1336, %v1337
        %v1340 = vrot.slane %v1339, 1
        %vm1341 = vcmp.gt.s32.totalorder %v1339, %v1340
        %v1342 = vsel %vm1341, %v1339, %v1340
        %s1343 = vtos %v1342
        %v1344 = vstv %s1261
        %vm1345 = vcmp.ge.s32.totalorder %v134, %v1344
        %vm1346 = vcmp.ge.s32.totalorder %v135, %v1344
        %v1347 = vstv %s1291
        %vm1348 = vcmp.le.s32.totalorder %v134, %v1347
        %vm1349 = vcmp.le.s32.totalorder %v135, %v1347
        %vm1350 = vmand %vm1345, %vm1348
        %vm1351 = vmand %vm1346, %vm1349
        %v1352 = vsel %vm1350, 1, 0
        %v1353 = vsel %vm1351, 1, 0
        %v1354 = vcvt.s32.f32 %v1352
        %v1355 = vcvt.s32.f32 %v1353
        %v1356 = vstv %s1317
        %vm1357 = vcmp.ge.s32.totalorder %v134, %v1356
        %vm1358 = vcmp.ge.s32.totalorder %v135, %v1356
        %v1359 = vstv %s1343
        %vm1360 = vcmp.le.s32.totalorder %v134, %v1359
        %vm1361 = vcmp.le.s32.totalorder %v135, %v1359
        %vm1362 = vmand %vm1357, %vm1360
        %vm1363 = vmand %vm1358, %vm1361
        %v1364 = vsel %vm1362, 1, 0
        %v1365 = vsel %vm1363, 1, 0
        %v1366 = vcvt.s32.f32 %v1364
        %v1367 = vcvt.s32.f32 %v1365
        %v1369 = vsel %vm291, %v212, 0
        %v1372 = vsel %vm291, %v213, 0
        %1374 = vmatprep.subr.mxu0 0.0
        %1375 = vmatpush1.msra.mxu0 %v1366
        %1376 = vmatprep.subr.mxu0 0.0
        %1377 = vmatpush1.msra.mxu0 %v1367
        %1378 = vmatprep.subr.mxu0 0.0
        %1379 = vmatpush1.msra.mxu0 0.0
        %1380 = vmatprep.subr.mxu0 0.0
        %1381 = vmatpush1.msra.mxu0 0.0
        %1382 = vmatprep.subr.mxu0 0.0
        %1383 = vmatpush1.msra.mxu0 0.0
        %1384 = vmatprep.subr.mxu0 0.0
        %1385 = vmatpush1.msra.mxu0 0.0
        %1386 = vmatprep.subr.mxu0 0.0
        %1387 = vmatpush1.msra.mxu0 0.0
        %1388 = vmatprep.subr.mxu0 0.0
        %1389 = vmatpush1.msra.mxu0 0.0
        %1390 = vmatprep.subr.mxu0 0.0
        %1391 = vmatpush1.msra.mxu0 0.0
        %1392 = vmatprep.subr.mxu0 0.0
        %1393 = vmatpush1.msra.mxu0 0.0
        %1394 = vmatprep.subr.mxu0 0.0
        %1395 = vmatpush1.msra.mxu0 0.0
        %1396 = vmatprep.subr.mxu0 0.0
        %1397 = vmatpush1.msra.mxu0 0.0
        %1398 = vmatprep.subr.mxu0 0.0
        %1399 = vmatpush1.msra.mxu0 0.0
        %1400 = vmatprep.subr.mxu0 0.0
        %1401 = vmatpush1.msra.mxu0 0.0
        %1402 = vmatprep.subr.mxu0 0.0
        %1403 = vmatpush1.msra.mxu0 0.0
        %1404 = vmatprep.subr.mxu0 0.0
        %1405 = vmatpush1.msra.mxu0 0.0
        %1406 = vmatprep.subr.mxu0 0.0
        %1407 = vmatpush1.msra.mxu0 0.0
        %1408 = vmatprep.subr.mxu0 0.0
        %1409 = vmatpush1.msra.mxu0 0.0
        %1410 = vmatprep.subr.mxu0 0.0
        %1411 = vmatpush1.msra.mxu0 0.0
        %1412 = vmatprep.subr.mxu0 0.0
        %1413 = vmatpush1.msra.mxu0 0.0
        %1414 = vmatprep.subr.mxu0 0.0
        %1415 = vmatpush1.msra.mxu0 0.0
        %1416 = vmatprep.subr.mxu0 0.0
        %1417 = vmatpush1.msra.mxu0 0.0
        %1418 = vmatprep.subr.mxu0 0.0
        %1419 = vmatpush1.msra.mxu0 0.0
        %1420 = vmatprep.subr.mxu0 0.0
        %1421 = vmatpush1.msra.mxu0 0.0
        %1422 = vmatprep.subr.mxu0 0.0
        %1423 = vmatpush1.msra.mxu0 0.0
        %1424 = vmatprep.subr.mxu0 0.0
        %1425 = vmatpush1.msra.mxu0 0.0
        %1426 = vmatprep.subr.mxu0 0.0
        %1427 = vmatpush1.msra.mxu0 0.0
        %1428 = vmatprep.subr.mxu0 0.0
        %1429 = vmatpush1.msra.mxu0 0.0
        %1430 = vmatprep.subr.mxu0 0.0
        %1431 = vmatpush1.msra.mxu0 0.0
        %1432 = vmatprep.subr.mxu0 0.0
        %1433 = vmatpush1.msra.mxu0 0.0
        %1434 = vmatprep.subr.mxu0 0.0
        %1435 = vmatpush1.msra.mxu0 0.0
        %1436 = vmatprep.subr.mxu0 0.0
        %1437 = vmatpush1.msra.mxu0 0.0
        %1438 = vmatprep.mubr.f32.mxu0 0.0
        %1439 = vmatmul.mubr.f32.gmra.mrb[0].mxu0 %v1369
        %v1440 = vpop.f32.mrb[0].mxu0
        %v1441 = vadd.f32 0.0, %v1440
        %v1442 = vpop.f32.mrb[0].mxu0
        %1443 = vmatprep.mubr.f32.mxu0 0.0
        %1444 = vmatmul.mubr.f32.gmra.mrb[0].mxu0 %v1372
        %v1445 = vpop.f32.mrb[0].mxu0
        %v1446 = vadd.f32 0.0, %v1445
        %v1447 = vpop.f32.mrb[0].mxu0
        %1448 = vdwg.mxu0
        %v1449 = vmul.f32 %v1354, %v1441
        %v1450 = vmul.f32 %v1355, %v1446
        %v1451 = vadd.f32 %v1070, %v1449
        %v1452 = vadd.f32 %v1071, %v1450
        %vm1453 = vcmp.eq.s32.totalorder %v257, 3
        %vm1454 = vcmp.eq.s32.totalorder %v258, 3
        %v1455 = vsel %vm1453, 1, 0
        %v1456 = vsel %vm1454, 1, 0
        %v1457 = vcvt.s32.f32 %v1455
        %v1458 = vcvt.s32.f32 %v1456
        %v1460 = vsel %vm291, %v1457, 0
        %v1463 = vsel %vm291, %v1458, 0
        %1465 = vmatprep.subr.mxu0 0.0
        %1466 = vmatpush1.msra.mxu0 1.0
        %1467 = vmatprep.subr.mxu0 0.0
        %1468 = vmatpush1.msra.mxu0 1.0
        %1469 = vmatprep.subr.mxu0 0.0
        %1470 = vmatpush1.msra.mxu0 0.0
        %1471 = vmatprep.subr.mxu0 0.0
        %1472 = vmatpush1.msra.mxu0 0.0
        %1473 = vmatprep.subr.mxu0 0.0
        %1474 = vmatpush1.msra.mxu0 0.0
        %1475 = vmatprep.subr.mxu0 0.0
        %1476 = vmatpush1.msra.mxu0 0.0
        %1477 = vmatprep.subr.mxu0 0.0
        %1478 = vmatpush1.msra.mxu0 0.0
        %1479 = vmatprep.subr.mxu0 0.0
        %1480 = vmatpush1.msra.mxu0 0.0
        %1481 = vmatprep.subr.mxu0 0.0
        %1482 = vmatpush1.msra.mxu0 0.0
        %1483 = vmatprep.subr.mxu0 0.0
        %1484 = vmatpush1.msra.mxu0 0.0
        %1485 = vmatprep.subr.mxu0 0.0
        %1486 = vmatpush1.msra.mxu0 0.0
        %1487 = vmatprep.subr.mxu0 0.0
        %1488 = vmatpush1.msra.mxu0 0.0
        %1489 = vmatprep.subr.mxu0 0.0
        %1490 = vmatpush1.msra.mxu0 0.0
        %1491 = vmatprep.subr.mxu0 0.0
        %1492 = vmatpush1.msra.mxu0 0.0
        %1493 = vmatprep.subr.mxu0 0.0
        %1494 = vmatpush1.msra.mxu0 0.0
        %1495 = vmatprep.subr.mxu0 0.0
        %1496 = vmatpush1.msra.mxu0 0.0
        %1497 = vmatprep.subr.mxu0 0.0
        %1498 = vmatpush1.msra.mxu0 0.0
        %1499 = vmatprep.subr.mxu0 0.0
        %1500 = vmatpush1.msra.mxu0 0.0
        %1501 = vmatprep.subr.mxu0 0.0
        %1502 = vmatpush1.msra.mxu0 0.0
        %1503 = vmatprep.subr.mxu0 0.0
        %1504 = vmatpush1.msra.mxu0 0.0
        %1505 = vmatprep.subr.mxu0 0.0
        %1506 = vmatpush1.msra.mxu0 0.0
        %1507 = vmatprep.subr.mxu0 0.0
        %1508 = vmatpush1.msra.mxu0 0.0
        %1509 = vmatprep.subr.mxu0 0.0
        %1510 = vmatpush1.msra.mxu0 0.0
        %1511 = vmatprep.subr.mxu0 0.0
        %1512 = vmatpush1.msra.mxu0 0.0
        %1513 = vmatprep.subr.mxu0 0.0
        %1514 = vmatpush1.msra.mxu0 0.0
        %1515 = vmatprep.subr.mxu0 0.0
        %1516 = vmatpush1.msra.mxu0 0.0
        %1517 = vmatprep.subr.mxu0 0.0
        %1518 = vmatpush1.msra.mxu0 0.0
        %1519 = vmatprep.subr.mxu0 0.0
        %1520 = vmatpush1.msra.mxu0 0.0
        %1521 = vmatprep.subr.mxu0 0.0
        %1522 = vmatpush1.msra.mxu0 0.0
        %1523 = vmatprep.subr.mxu0 0.0
        %1524 = vmatpush1.msra.mxu0 0.0
        %1525 = vmatprep.subr.mxu0 0.0
        %1526 = vmatpush1.msra.mxu0 0.0
        %1527 = vmatprep.subr.mxu0 0.0
        %1528 = vmatpush1.msra.mxu0 0.0
        %1529 = vmatprep.mubr.f32.mxu0 0.0
        %1530 = vmatmul.mubr.f32.gmra.mrb[0].mxu0 %v1460
        %v1531 = vpop.f32.mrb[0].mxu0
        %v1532 = vadd.f32 0.0, %v1531
        %v1533 = vpop.f32.mrb[0].mxu0
        %1534 = vmatprep.mubr.f32.mxu0 0.0
        %1535 = vmatmul.mubr.f32.gmra.mrb[0].mxu0 %v1463
        %v1536 = vpop.f32.mrb[0].mxu0
        %v1537 = vadd.f32 0.0, %v1536
        %v1538 = vpop.f32.mrb[0].mxu0
        %1539 = vdwg.mxu0
        %1540 = vmatprep.subr.mxu0 0.0
        %1541 = vmatpush1.msra.mxu0 %v1457
        %1542 = vmatprep.subr.mxu0 0.0
        %1543 = vmatpush1.msra.mxu0 %v1458
        %1544 = vmatprep.subr.mxu0 0.0
        %1545 = vmatpush1.msra.mxu0 0.0
        %1546 = vmatprep.subr.mxu0 0.0
        %1547 = vmatpush1.msra.mxu0 0.0
        %1548 = vmatprep.subr.mxu0 0.0
        %1549 = vmatpush1.msra.mxu0 0.0
        %1550 = vmatprep.subr.mxu0 0.0
        %1551 = vmatpush1.msra.mxu0 0.0
        %1552 = vmatprep.subr.mxu0 0.0
        %1553 = vmatpush1.msra.mxu0 0.0
        %1554 = vmatprep.subr.mxu0 0.0
        %1555 = vmatpush1.msra.mxu0 0.0
        %1556 = vmatprep.subr.mxu0 0.0
        %1557 = vmatpush1.msra.mxu0 0.0
        %1558 = vmatprep.subr.mxu0 0.0
        %1559 = vmatpush1.msra.mxu0 0.0
        %1560 = vmatprep.subr.mxu0 0.0
        %1561 = vmatpush1.msra.mxu0 0.0
        %1562 = vmatprep.subr.mxu0 0.0
        %1563 = vmatpush1.msra.mxu0 0.0
        %1564 = vmatprep.subr.mxu0 0.0
        %1565 = vmatpush1.msra.mxu0 0.0
        %1566 = vmatprep.subr.mxu0 0.0
        %1567 = vmatpush1.msra.mxu0 0.0
        %1568 = vmatprep.subr.mxu0 0.0
        %1569 = vmatpush1.msra.mxu0 0.0
        %1570 = vmatprep.subr.mxu0 0.0
        %1571 = vmatpush1.msra.mxu0 0.0
        %1572 = vmatprep.subr.mxu0 0.0
        %1573 = vmatpush1.msra.mxu0 0.0
        %1574 = vmatprep.subr.mxu0 0.0
        %1575 = vmatpush1.msra.mxu0 0.0
        %1576 = vmatprep.subr.mxu0 0.0
        %1577 = vmatpush1.msra.mxu0 0.0
        %1578 = vmatprep.subr.mxu0 0.0
        %1579 = vmatpush1.msra.mxu0 0.0
        %1580 = vmatprep.subr.mxu0 0.0
        %1581 = vmatpush1.msra.mxu0 0.0
        %1582 = vmatprep.subr.mxu0 0.0
        %1583 = vmatpush1.msra.mxu0 0.0
        %1584 = vmatprep.subr.mxu0 0.0
        %1585 = vmatpush1.msra.mxu0 0.0
        %1586 = vmatprep.subr.mxu0 0.0
        %1587 = vmatpush1.msra.mxu0 0.0
        %1588 = vmatprep.subr.mxu0 0.0
        %1589 = vmatpush1.msra.mxu0 0.0
        %1590 = vmatprep.subr.mxu0 0.0
        %1591 = vmatpush1.msra.mxu0 0.0
        %1592 = vmatprep.subr.mxu0 0.0
        %1593 = vmatpush1.msra.mxu0 0.0
        %1594 = vmatprep.subr.mxu0 0.0
        %1595 = vmatpush1.msra.mxu0 0.0
        %1596 = vmatprep.subr.mxu0 0.0
        %1597 = vmatpush1.msra.mxu0 0.0
        %1598 = vmatprep.subr.mxu0 0.0
        %1599 = vmatpush1.msra.mxu0 0.0
        %1600 = vmatprep.subr.mxu0 0.0
        %1601 = vmatpush1.msra.mxu0 0.0
        %1602 = vmatprep.subr.mxu0 0.0
        %1603 = vmatpush1.msra.mxu0 0.0
        %1604 = vmatprep.mubr.f32.mxu0 0.0
        %1605 = vmatmul.mubr.f32.gmra.mrb[0].mxu0 %v393
        %v1606 = vpop.f32.mrb[0].mxu0
        %v1607 = vadd.f32 0.0, %v1606
        %v1608 = vpop.f32.mrb[0].mxu0
        %1609 = vdwg.mxu0
        %vm1610 = vcmp.gt.f32.partialorder %v1532, 0.0
        %vm1611 = vcmp.gt.f32.partialorder %v1537, 0.0
        %vm1612 = vcmp.gt.f32.partialorder %v1607, 0.0
        %v1613 = vsel %vm1610, %v134, 16
        %v1614 = vsel %vm1611, %v135, 16
        %v1615 = vsel %vm470, %v1613, 2147483647
        %v1616 = vsel %vm470, %v1614, 2147483647
        %vm1617 = vcmp.lt.s32.totalorder %v1615, %v1616
        %v1618 = vsel %vm1617, %v1615, %v1616
        %v1619 = vand.u32 %v1618, 65535
        %v1620 = vshra.s32 %v1618, 16
        %v1621 = vcvt.s32.f32 %v1619
        %v1622 = vcvt.s32.f32 %v1620
        %1623 = vmin.xlane.f32.xlu0 %v1622
        %v1624 = vpop.xlane.xlu0 %1623
        %vm1625 = vcmp.eq.f32.partialorder %v1622, %v1624
        %v1626 = vsel %vm1625, %v1621, inf
        %1627 = vmin.xlane.f32.xlu0 %v1626
        %v1628 = vpop.xlane.xlu0 %1627
        %v1629 = vcvt.f32.s32 %v1628
        %v1630 = vcvt.f32.s32 %v1624
        %v1631 = vshll.u32 %v1630, 16
        %v1632 = vadd.s32 %v1631, %v1629
        %v1633 = vrot.slane %v1632, 4
        %vm1634 = vcmp.lt.s32.totalorder %v1632, %v1633
        %v1635 = vsel %vm1634, %v1632, %v1633
        %v1636 = vrot.slane %v1635, 2
        %vm1637 = vcmp.lt.s32.totalorder %v1635, %v1636
        %v1638 = vsel %vm1637, %v1635, %v1636
        %v1639 = vrot.slane %v1638, 1
        %vm1640 = vcmp.lt.s32.totalorder %v1638, %v1639
        %v1641 = vsel %vm1640, %v1638, %v1639
        %s1642 = vtos %v1641
        %v1643 = vsel %vm1610, %v134, 4294967295
        %v1644 = vsel %vm1611, %v135, 4294967295
        %v1645 = vsel %vm470, %v1643, 2147483648
        %v1646 = vsel %vm470, %v1644, 2147483648
        %vm1647 = vcmp.gt.s32.totalorder %v1645, %v1646
        %v1648 = vsel %vm1647, %v1645, %v1646
        %v1649 = vand.u32 %v1648, 65535
        %v1650 = vshra.s32 %v1648, 16
        %v1651 = vcvt.s32.f32 %v1649
        %v1652 = vcvt.s32.f32 %v1650
        %1653 = vmax.xlane.f32.xlu0 %v1652
        %v1654 = vpop.xlane.xlu0 %1653
        %vm1655 = vcmp.eq.f32.partialorder %v1652, %v1654
        %v1656 = vsel %vm1655, %v1651, -inf
        %1657 = vmax.xlane.f32.xlu0 %v1656
        %v1658 = vpop.xlane.xlu0 %1657
        %v1659 = vcvt.f32.s32 %v1658
        %v1660 = vcvt.f32.s32 %v1654
        %v1661 = vshll.u32 %v1660, 16
        %v1662 = vadd.s32 %v1661, %v1659
        %v1663 = vrot.slane %v1662, 4
        %vm1664 = vcmp.gt.s32.totalorder %v1662, %v1663
        %v1665 = vsel %vm1664, %v1662, %v1663
        %v1666 = vrot.slane %v1665, 2
        %vm1667 = vcmp.gt.s32.totalorder %v1665, %v1666
        %v1668 = vsel %vm1667, %v1665, %v1666
        %v1669 = vrot.slane %v1668, 1
        %vm1670 = vcmp.gt.s32.totalorder %v1668, %v1669
        %v1671 = vsel %vm1670, %v1668, %v1669
        %s1672 = vtos %v1671
        %v1673 = vsel %vm1612, %v137, 16
        %v1674 = vsel %vm530, %v1673, 2147483647
        %v1675 = vand.u32 %v1674, 65535
        %v1676 = vshra.s32 %v1674, 16
        %v1677 = vcvt.s32.f32 %v1675
        %v1678 = vcvt.s32.f32 %v1676
        %1679 = vmin.xlane.f32.xlu0 %v1678
        %v1680 = vpop.xlane.xlu0 %1679
        %vm1681 = vcmp.eq.f32.partialorder %v1678, %v1680
        %v1682 = vsel %vm1681, %v1677, inf
        %1683 = vmin.xlane.f32.xlu0 %v1682
        %v1684 = vpop.xlane.xlu0 %1683
        %v1685 = vcvt.f32.s32 %v1684
        %v1686 = vcvt.f32.s32 %v1680
        %v1687 = vshll.u32 %v1686, 16
        %v1688 = vadd.s32 %v1687, %v1685
        %v1689 = vrot.slane %v1688, 4
        %vm1690 = vcmp.lt.s32.totalorder %v1688, %v1689
        %v1691 = vsel %vm1690, %v1688, %v1689
        %v1692 = vrot.slane %v1691, 2
        %vm1693 = vcmp.lt.s32.totalorder %v1691, %v1692
        %v1694 = vsel %vm1693, %v1691, %v1692
        %v1695 = vrot.slane %v1694, 1
        %vm1696 = vcmp.lt.s32.totalorder %v1694, %v1695
        %v1697 = vsel %vm1696, %v1694, %v1695
        %s1698 = vtos %v1697
        %v1699 = vsel %vm1612, %v137, 4294967295
        %v1700 = vsel %vm530, %v1699, 2147483648
        %v1701 = vand.u32 %v1700, 65535
        %v1702 = vshra.s32 %v1700, 16
        %v1703 = vcvt.s32.f32 %v1701
        %v1704 = vcvt.s32.f32 %v1702
        %1705 = vmax.xlane.f32.xlu0 %v1704
        %v1706 = vpop.xlane.xlu0 %1705
        %vm1707 = vcmp.eq.f32.partialorder %v1704, %v1706
        %v1708 = vsel %vm1707, %v1703, -inf
        %1709 = vmax.xlane.f32.xlu0 %v1708
        %v1710 = vpop.xlane.xlu0 %1709
        %v1711 = vcvt.f32.s32 %v1710
        %v1712 = vcvt.f32.s32 %v1706
        %v1713 = vshll.u32 %v1712, 16
        %v1714 = vadd.s32 %v1713, %v1711
        %v1715 = vrot.slane %v1714, 4
        %vm1716 = vcmp.gt.s32.totalorder %v1714, %v1715
        %v1717 = vsel %vm1716, %v1714, %v1715
        %v1718 = vrot.slane %v1717, 2
        %vm1719 = vcmp.gt.s32.totalorder %v1717, %v1718
        %v1720 = vsel %vm1719, %v1717, %v1718
        %v1721 = vrot.slane %v1720, 1
        %vm1722 = vcmp.gt.s32.totalorder %v1720, %v1721
        %v1723 = vsel %vm1722, %v1720, %v1721
        %s1724 = vtos %v1723
        %v1725 = vstv %s1642
        %vm1726 = vcmp.ge.s32.totalorder %v134, %v1725
        %vm1727 = vcmp.ge.s32.totalorder %v135, %v1725
        %v1728 = vstv %s1672
        %vm1729 = vcmp.le.s32.totalorder %v134, %v1728
        %vm1730 = vcmp.le.s32.totalorder %v135, %v1728
        %vm1731 = vmand %vm1726, %vm1729
        %vm1732 = vmand %vm1727, %vm1730
        %v1733 = vsel %vm1731, 1, 0
        %v1734 = vsel %vm1732, 1, 0
        %v1735 = vcvt.s32.f32 %v1733
        %v1736 = vcvt.s32.f32 %v1734
        %v1737 = vstv %s1698
        %vm1738 = vcmp.ge.s32.totalorder %v134, %v1737
        %vm1739 = vcmp.ge.s32.totalorder %v135, %v1737
        %v1740 = vstv %s1724
        %vm1741 = vcmp.le.s32.totalorder %v134, %v1740
        %vm1742 = vcmp.le.s32.totalorder %v135, %v1740
        %vm1743 = vmand %vm1738, %vm1741
        %vm1744 = vmand %vm1739, %vm1742
        %v1745 = vsel %vm1743, 1, 0
        %v1746 = vsel %vm1744, 1, 0
        %v1747 = vcvt.s32.f32 %v1745
        %v1748 = vcvt.s32.f32 %v1746
        %v1750 = vsel %vm291, %v253, 0
        %v1753 = vsel %vm291, %v254, 0
        %1755 = vmatprep.subr.mxu0 0.0
        %1756 = vmatpush1.msra.mxu0 %v1747
        %1757 = vmatprep.subr.mxu0 0.0
        %1758 = vmatpush1.msra.mxu0 %v1748
        %1759 = vmatprep.subr.mxu0 0.0
        %1760 = vmatpush1.msra.mxu0 0.0
        %1761 = vmatprep.subr.mxu0 0.0
        %1762 = vmatpush1.msra.mxu0 0.0
        %1763 = vmatprep.subr.mxu0 0.0
        %1764 = vmatpush1.msra.mxu0 0.0
        %1765 = vmatprep.subr.mxu0 0.0
        %1766 = vmatpush1.msra.mxu0 0.0
        %1767 = vmatprep.subr.mxu0 0.0
        %1768 = vmatpush1.msra.mxu0 0.0
        %1769 = vmatprep.subr.mxu0 0.0
        %1770 = vmatpush1.msra.mxu0 0.0
        %1771 = vmatprep.subr.mxu0 0.0
        %1772 = vmatpush1.msra.mxu0 0.0
        %1773 = vmatprep.subr.mxu0 0.0
        %1774 = vmatpush1.msra.mxu0 0.0
        %1775 = vmatprep.subr.mxu0 0.0
        %1776 = vmatpush1.msra.mxu0 0.0
        %1777 = vmatprep.subr.mxu0 0.0
        %1778 = vmatpush1.msra.mxu0 0.0
        %1779 = vmatprep.subr.mxu0 0.0
        %1780 = vmatpush1.msra.mxu0 0.0
        %1781 = vmatprep.subr.mxu0 0.0
        %1782 = vmatpush1.msra.mxu0 0.0
        %1783 = vmatprep.subr.mxu0 0.0
        %1784 = vmatpush1.msra.mxu0 0.0
        %1785 = vmatprep.subr.mxu0 0.0
        %1786 = vmatpush1.msra.mxu0 0.0
        %1787 = vmatprep.subr.mxu0 0.0
        %1788 = vmatpush1.msra.mxu0 0.0
        %1789 = vmatprep.subr.mxu0 0.0
        %1790 = vmatpush1.msra.mxu0 0.0
        %1791 = vmatprep.subr.mxu0 0.0
        %1792 = vmatpush1.msra.mxu0 0.0
        %1793 = vmatprep.subr.mxu0 0.0
        %1794 = vmatpush1.msra.mxu0 0.0
        %1795 = vmatprep.subr.mxu0 0.0
        %1796 = vmatpush1.msra.mxu0 0.0
        %1797 = vmatprep.subr.mxu0 0.0
        %1798 = vmatpush1.msra.mxu0 0.0
        %1799 = vmatprep.subr.mxu0 0.0
        %1800 = vmatpush1.msra.mxu0 0.0
        %1801 = vmatprep.subr.mxu0 0.0
        %1802 = vmatpush1.msra.mxu0 0.0
        %1803 = vmatprep.subr.mxu0 0.0
        %1804 = vmatpush1.msra.mxu0 0.0
        %1805 = vmatprep.subr.mxu0 0.0
        %1806 = vmatpush1.msra.mxu0 0.0
        %1807 = vmatprep.subr.mxu0 0.0
        %1808 = vmatpush1.msra.mxu0 0.0
        %1809 = vmatprep.subr.mxu0 0.0
        %1810 = vmatpush1.msra.mxu0 0.0
        %1811 = vmatprep.subr.mxu0 0.0
        %1812 = vmatpush1.msra.mxu0 0.0
        %1813 = vmatprep.subr.mxu0 0.0
        %1814 = vmatpush1.msra.mxu0 0.0
        %1815 = vmatprep.subr.mxu0 0.0
        %1816 = vmatpush1.msra.mxu0 0.0
        %1817 = vmatprep.subr.mxu0 0.0
        %1818 = vmatpush1.msra.mxu0 0.0
        %1819 = vmatprep.mubr.f32.mxu0 0.0
        %1820 = vmatmul.mubr.f32.gmra.mrb[0].mxu0 %v1750
        %v1821 = vpop.f32.mrb[0].mxu0
        %v1822 = vadd.f32 0.0, %v1821
        %v1823 = vpop.f32.mrb[0].mxu0
        %1824 = vmatprep.mubr.f32.mxu0 0.0
        %1825 = vmatmul.mubr.f32.gmra.mrb[0].mxu0 %v1753
        %v1826 = vpop.f32.mrb[0].mxu0
        %v1827 = vadd.f32 0.0, %v1826
        %v1828 = vpop.f32.mrb[0].mxu0
        %1829 = vdwg.mxu0
        %v1830 = vmul.f32 %v1735, %v1822
        %v1831 = vmul.f32 %v1736, %v1827
        %v1832 = vadd.f32 %v1451, %v1830
        %v1833 = vadd.f32 %v1452, %v1831
        %v1834 = vsel %vm470, %v1832, 0.0
        %v1835 = vsel %vm470, %v1833, 0.0
        %v1836 = vadd.f32 %v1834, %v1835
        %1837 = vadd.xlane.f32.xlu0 %v1836
        %v1838 = vpop.xlane.xlu0 %1837
        %v1839 = vrot.slane %v1838, 4
        %v1840 = vadd.f32 %v1838, %v1839
        %v1841 = vrot.slane %v1840, 2
        %v1842 = vadd.f32 %v1840, %v1841
        %v1843 = vrot.slane %v1842, 1
        %v1844 = vadd.f32 %v1842, %v1843
        %s1845 = vtos %v1844
        %v1846 = vstv %s1845
        %v1847 = vsub.f32 %v304, %v1846
        %vm1848 = vcmask 0
        %1849 = vst.msk [vmem:[%s132] sm:$0x1] %vm1848, %v1847
        %p1850 = scmp.lt.s32.totalorder %s15, 1
        %s1851 = scalar_select %p1850, %s15, 1
        %s1852 = scalar_lea.vmem %s1, %s1851
        // Predicated region
        $region29: #{tpu_custom_call.1} parent=23 // pred_check
          %p1853 = pneg %p59
        $region30: #{tpu_custom_call.1} parent=23 // pred_check_branch
          %1855 = sbr.rel (%p1853) target = $region32
        $region31: #{tpu_custom_call.1} parent=23 // pred_region
          _
        $region32: #{tpu_custom_call.1} parent=23 // pred_fallthru
          _
      $region24: #{tpu_custom_call.1} parent=5 // pred_fallthru
        _
      %p1856 = scmp.le.s32.totalorder 2, %s10
      // Predicated region
      $region33: #{tpu_custom_call.1} parent=5 // pred_check
        %p1857 = pneg %p1856
      $region34: #{tpu_custom_call.1} parent=5 // pred_check_branch
        %1859 = sbr.rel (%p1857) target = $region36
      $region35: #{tpu_custom_call.1} parent=5 // pred_region
        %s1860 = ssub.s32 %s10, 2
        // Predicated region
        $region37: #{tpu_custom_call.1} parent=35 // pred_check
          %p1861 = pneg %p65
        $region38: #{tpu_custom_call.1} parent=35 // pred_check_branch
          %1863 = sbr.rel (%p1861) target = $region40
        $region39: #{tpu_custom_call.1} parent=35 // pred_region
          %p1864 = scmp.lt.s32.totalorder %s16, 1
          %s1865 = scalar_select %p1864, %s16, 1
          %s1866 = scalar_lea.vmem %s1, %s1865
        $region40: #{tpu_custom_call.1} parent=35 // pred_fallthru
          _
      $region36: #{tpu_custom_call.1} parent=5 // pred_fallthru
        _
    $region6: #{tpu_custom_call.1} parent=1 // loop_footer
      %s14 = sadd.s32 1, %s10
    $region7: #{tpu_custom_call.1} parent=1 // loop_footer_branch
      %9 = sbr.rel target = $region3
    $region8: #{tpu_custom_call.1} parent=1 // loop_exit
      _
    %1867 = vsyncpa [#allocation3], 1
    %s1868 = scalar_lea.sflag [#allocation3], 1
    %1869 = vsyncpa %s1868, 1

</llo_original>
